<compile_context>
chip_gen: v5e
topology: v5e:2x2
jax: 0.10.0
libtpu: 0.0.40
codegen_flags: <defaults>
</compile_context>

<pallas_src>
import functools

import jax
import jax.numpy as jnp
from jax.experimental import pallas as pl
from jax.experimental.pallas import tpu as pltpu


# ----------------------------------------------------------------------------------------------
# VMEM budget (per TPU generation, with headroom).
# ----------------------------------------------------------------------------------------------
def _vmem_limit_bytes():
    try:
        cap = pltpu.get_tpu_info().vmem_capacity_bytes
    except Exception:
        cap = 64 * 1024 * 1024  # conservative fallback (safe on every generation)
    cap = min(int(cap), 128 * 1024 * 1024)
    return int(cap * 0.8)  # v5e/v6e: ~102 MiB of 128; v7x: ~51 MiB of 64


def _round_up_128(v):
    return max(128, -(-v // 128) * 128)


# ----------------------------------------------------------------------------------------------
# Path A: fully fused single pallas_call (adjacency VMEM-resident across all layers).
# ----------------------------------------------------------------------------------------------
def _graphsage_fused_kernel(adj_ref, scale_ref, x_ref, *rest, num_layers, fins):
    """rest = [wcat_0, b_0, ..., wcat_{L-1}, b_{L-1}, o_ref, hcat_scratch]."""
    o_ref = rest[2 * num_layers]
    hcat_ref = rest[2 * num_layers + 1]

    h = x_ref[...]  # (N, Fin0) bf16, lane-dense

    for l in range(num_layers):
        fi = fins[l]
        wcat = rest[2 * l][...]        # (2*fi, fo) bf16 == [W_self; W_neigh]
        b = rest[2 * l + 1][...]       # (1, fo) f32 (last layer: padded lanes = -1e30)

        # Mean aggregation: exact 0/1 mask matmul, per-row 1/deg scale applied in f32 after MXU.
        agg = jnp.dot(adj_ref[...], h, preferred_element_type=jnp.float32)
        h_neigh = (scale_ref[...] * agg).astype(jnp.bfloat16)

        # Reused VMEM scratch instead of jnp.concatenate -> fused K=2*fi projection.
        hcat_ref[:, :fi] = h
        hcat_ref[:, fi:2 * fi] = h_neigh
        out = jnp.dot(hcat_ref[:, :2 * fi], wcat, preferred_element_type=jnp.float32) + b

        if l < num_layers - 1:
            h = jnp.maximum(out, 0.0).astype(jnp.bfloat16)
        else:
            # Numerically-stable log-softmax in f32 (padded class lanes carry bias -1e30,
            # exp underflows to exactly 0, so real lanes are unchanged).
            m = jnp.max(out, axis=-1, keepdims=True)
            s = out - m
            lse = jnp.log(jnp.sum(jnp.exp(s), axis=-1, keepdims=True))
            o_ref[...] = (s - lse).astype(o_ref.dtype)


def _graphsage_fused(adj01, scale, x_bf, layers, fins, fouts, n_pad, vmem_limit):
    num_layers = len(layers)
    c_pad = fouts[-1]
    max_fin = max(fins)

    kernel_inputs = [adj01, scale, x_bf]
    flops = 0
    for l, (ws_p, wn_p, b_p) in enumerate(layers):
        fi, fo = fins[l], fouts[l]
        wcat = jnp.concatenate([ws_p, wn_p], axis=0)  # (2*fi, fo) bf16
        kernel_inputs += [wcat, b_p]
        flops += 2 * n_pad * n_pad * fi          # aggregation (adj01 @ h)
        flops += 2 * n_pad * (2 * fi) * fo       # fused self+neigh projection

    bytes_accessed = (sum(int(a.size) * a.dtype.itemsize for a in kernel_inputs)
                      + n_pad * c_pad * 4)

    kernel = functools.partial(_graphsage_fused_kernel,
                               num_layers=num_layers, fins=tuple(fins))
    return pl.pallas_call(
        kernel,
        out_shape=jax.ShapeDtypeStruct((n_pad, c_pad), jnp.float32),
        in_specs=[pl.BlockSpec(memory_space=pltpu.VMEM) for _ in kernel_inputs],
        out_specs=pl.BlockSpec(memory_space=pltpu.VMEM),
        scratch_shapes=[pltpu.VMEM((n_pad, 2 * max_fin), jnp.bfloat16)],
        compiler_params=pltpu.CompilerParams(vmem_limit_bytes=vmem_limit),
        cost_estimate=pl.CostEstimate(flops=flops,
                                      transcendentals=n_pad * c_pad,
                                      bytes_accessed=bytes_accessed),
    )(*kernel_inputs)


# ----------------------------------------------------------------------------------------------
# Path B: per-layer gridded kernel (for graphs whose adjacency does not fit VMEM).
# ----------------------------------------------------------------------------------------------
def _sage_layer_tiled_kernel(adj_ref, hk_ref, hi_ref, scale_ref, ws_ref, wn_ref, b_ref,
                             o_ref, acc_ref, *, is_last):
    k = pl.program_id(1)

    @pl.when(k == 0)
    def _():
        acc_ref[...] = jnp.zeros_like(acc_ref)

    # Accumulate the neighbor sum over contraction tiles (reduction axis last in grid).
    acc_ref[...] += jnp.dot(adj_ref[...], hk_ref[...], preferred_element_type=jnp.float32)

    @pl.when(k == pl.num_programs(1) - 1)
    def _():
        h_neigh = (scale_ref[...] * acc_ref[...]).astype(jnp.bfloat16)
        out = (jnp.dot(hi_ref[...], ws_ref[...], preferred_element_type=jnp.float32)
               + jnp.dot(h_neigh, wn_ref[...], preferred_element_type=jnp.float32)
               + b_ref[...])
        if is_last:
            m = jnp.max(out, axis=-1, keepdims=True)
            s = out - m
            lse = jnp.log(jnp.sum(jnp.exp(s), axis=-1, keepdims=True))
            o_ref[...] = (s - lse).astype(o_ref.dtype)
        else:
            o_ref[...] = jnp.maximum(out, 0.0).astype(o_ref.dtype)


def _sage_layer_tiled(adj01, scale, h, ws, wn, b, *, is_last, vmem_limit, tile=None):
    n = adj01.shape[0]
    fi, fo = ws.shape

    if tile is None:
        tile = next(t for t in (512, 256, 128) if n % t == 0)
    tm = tk = tile

    out_dtype = jnp.float32 if is_last else jnp.bfloat16
    flops = 2 * n * n * fi + 2 * 2 * n * fi * fo
    bytes_accessed = (int(adj01.size) * 2 + 2 * int(h.size) * 2 + int(scale.size) * 4
                      + 2 * int(ws.size) * 2 + int(b.size) * 4
                      + n * fo * (4 if is_last else 2))

    kernel = functools.partial(_sage_layer_tiled_kernel, is_last=is_last)
    return pl.pallas_call(
        kernel,
        out_shape=jax.ShapeDtypeStruct((n, fo), out_dtype),
        grid_spec=pltpu.PrefetchScalarGridSpec(
            num_scalar_prefetch=0,
            grid=(n // tm, n // tk),
            in_specs=[
                pl.BlockSpec((tm, tk), lambda i, k: (i, k)),   # adjacency tile
                pl.BlockSpec((tk, fi), lambda i, k: (k, 0)),   # h rows for aggregation
                pl.BlockSpec((tm, fi), lambda i, k: (i, 0)),   # h rows for self-projection
                pl.BlockSpec((tm, 1), lambda i, k: (i, 0)),    # per-row 1/deg scale
                pl.BlockSpec((fi, fo), lambda i, k: (0, 0)),   # W_self
                pl.BlockSpec((fi, fo), lambda i, k: (0, 0)),   # W_neigh
                pl.BlockSpec((1, fo), lambda i, k: (0, 0)),    # bias
            ],
            out_specs=pl.BlockSpec((tm, fo), lambda i, k: (i, 0)),
            scratch_shapes=[pltpu.VMEM((tm, fi), jnp.float32)],
        ),
        compiler_params=pltpu.CompilerParams(
            dimension_semantics=("parallel", "arbitrary"),
            vmem_limit_bytes=vmem_limit,
        ),
        cost_estimate=pl.CostEstimate(flops=flops,
                                      transcendentals=(n * fo if is_last else 0),
                                      bytes_accessed=bytes_accessed),
    )(adj01, h, h, scale, ws, wn, b)


# ----------------------------------------------------------------------------------------------
# Wrapper.
# ----------------------------------------------------------------------------------------------
def graphsage_forward(adj, features, params, *, force_tiled=False, tile=None):
    """adj: (N, N) 0/1 adjacency (float). params: list of (w_self, w_neigh, bias) per layer."""
    n0, f0 = features.shape
    num_layers = len(params)
    n_classes = params[-1][0].shape[1]

    n_pad = _round_up_128(n0)
    fins = [_round_up_128(p[0].shape[0]) for p in params]
    fouts = [_round_up_128(p[0].shape[1]) for p in params]
    c_pad = fouts[-1]

    # Exact 0/1 adjacency mask (bf16 container), per-row 1/deg scale kept in f32.
    deg = jnp.maximum(jnp.sum(adj, axis=1, keepdims=True), 1.0)
    scale = jnp.pad(1.0 / deg, ((0, n_pad - n0), (0, 0)),
                    constant_values=1.0).astype(jnp.float32)
    adj01 = jnp.pad(adj, ((0, n_pad - n0), (0, n_pad - n0))).astype(jnp.bfloat16)

    x_bf = jnp.pad(features, ((0, n_pad - n0), (0, fins[0] - f0))).astype(jnp.bfloat16)

    # Zero-pad every weight to lane-dense (multiple-of-128) widths; padded input rows multiply
    # zero feature columns, padded output columns stay exactly zero through relu.
    layers = []
    for l, (ws, wn, b) in enumerate(params):
        fi_raw, fo_raw = ws.shape
        fi, fo = fins[l], fouts[l]
        pad_w = ((0, fi - fi_raw), (0, fo - fo_raw))
        ws_p = jnp.pad(ws, pad_w).astype(jnp.bfloat16)
        wn_p = jnp.pad(wn, pad_w).astype(jnp.bfloat16)
        bias_pad_val = -1e30 if l == num_layers - 1 else 0.0  # kill padded class lanes in softmax
        b_p = jnp.pad(b.reshape(1, fo_raw).astype(jnp.float32),
                      ((0, 0), (0, fo - fo_raw)), constant_values=bias_pad_val)
        layers.append((ws_p, wn_p, b_p))

    vmem_limit = _vmem_limit_bytes()

    # Rough VMEM footprint of the fused design (adj + activations + scratch + weights + slack).
    max_fin = max(fins)
    fused_bytes = (2 * n_pad * n_pad
                   + 4 * n_pad
                   + 2 * n_pad * fins[0]
                   + 2 * n_pad * 2 * max_fin
                   + 4 * n_pad * c_pad
                   + sum(2 * 2 * fi * fo + 4 * fo for fi, fo in zip(fins, fouts))
                   + 6 * n_pad * max(max_fin, c_pad))

    use_fused = (not force_tiled) and (fused_bytes <= int(0.7 * vmem_limit))

    if use_fused:
        out_padded = _graphsage_fused(adj01, scale, x_bf, layers, fins, fouts,
                                      n_pad, vmem_limit)
    else:
        h = x_bf
        for l, (ws_p, wn_p, b_p) in enumerate(layers):
            h = _sage_layer_tiled(adj01, scale, h, ws_p, wn_p, b_p,
                                  is_last=(l == num_layers - 1),
                                  vmem_limit=vmem_limit, tile=tile)
        out_padded = h

    return out_padded[:n0, :n_classes]


def graphsage_reference(adj, features, params):
    """Pure-JAX f32 reference matching the PyTorch module semantics."""
    deg = jnp.maximum(jnp.sum(adj, axis=1, keepdims=True), 1.0)
    adj_norm = adj / deg
    h = features
    for i, (ws, wn, b) in enumerate(params):
        h_neigh = adj_norm @ h
        h = h @ ws + h_neigh @ wn + b.reshape(1, -1)
        if i < len(params) - 1:
            h = jnp.maximum(h, 0.0)
    return jax.nn.log_softmax(h, axis=1)


def init_params(key, in_feats, n_hidden, n_classes, n_layers):
    """n_layers+1 SAGEConv layers: in->hidden, (n_layers-1)x hidden->hidden, hidden->classes."""
    dims = [(in_feats, n_hidden)]
    dims += [(n_hidden, n_hidden)] * (n_layers - 1)
    dims += [(n_hidden, n_classes)]
    params = []
    for (fi, fo) in dims:
        key, k1, k2 = jax.random.split(key, 3)
        w_self = jax.random.normal(k1, (fi, fo), jnp.float32) * 0.1
        w_neigh = jax.random.normal(k2, (fi, fo), jnp.float32) * 0.1
        bias = jnp.zeros((1, fo), jnp.float32)
        params.append((w_self, w_neigh, bias))
    return params


if __name__ == "__main__":
    in_feats = 64
    n_hidden = 64
    n_classes = 16
    n_layers = 2  # -> 3 SAGEConv layers total

    key = jax.random.PRNGKey(0)
    k_feat, k_adj, k_param, k_feat2, k_adj2 = jax.random.split(key, 5)

    params = init_params(k_param, in_feats, n_hidden, n_classes, n_layers)

    def make_graph(k_f, k_a, n):
        feats = jax.random.normal(k_f, (n, in_feats), jnp.float32)
        a = (jax.random.uniform(k_a, (n, n)) < 0.05).astype(jnp.float32)
        return a, feats

    # 1) Small graph -> fully fused single-pallas_call path (adjacency VMEM-resident).
    adj_s, feat_s = make_graph(k_feat, k_adj, 128)
    out_fused = jax.block_until_ready(graphsage_forward(adj_s, feat_s, params))
    ref_s = graphsage_reference(adj_s, feat_s, params)
    assert out_fused.shape == (128, n_classes)
    assert bool(jnp.all(jnp.abs(jnp.sum(jnp.exp(out_fused), axis=1) - 1.0) < 1e-3))
    assert bool(jnp.max(jnp.abs(out_fused - ref_s)) < 0.1)

    # 2) Per-layer gridded path (forced, small tiles so the accumulator/grid logic is exercised).
    adj_l, feat_l = make_graph(k_feat2, k_adj2, 256)
    out_tiled = jax.block_until_ready(
        graphsage_forward(adj_l, feat_l, params, force_tiled=True, tile=128))
    ref_l = graphsage_reference(adj_l, feat_l, params)
    assert out_tiled.shape == (256, n_classes)
    assert bool(jnp.all(jnp.abs(jnp.sum(jnp.exp(out_tiled), axis=1) - 1.0) < 1e-3))
    assert bool(jnp.max(jnp.abs(out_tiled - ref_l)) < 0.1)

    print("KERNEL_OK")
</pallas_src>

<mosaic_0001>
module attributes {stable_mosaic.version = 11 : i64} {
  func.func @_graphsage_fused_kernel(%arg0: memref<128x128xbf16, #tpu.memory_space<vmem>>, %arg1: memref<128x1xf32, #tpu.memory_space<vmem>>, %arg2: memref<128x128xbf16, #tpu.memory_space<vmem>>, %arg3: memref<256x128xbf16, #tpu.memory_space<vmem>>, %arg4: memref<1x128xf32, #tpu.memory_space<vmem>>, %arg5: memref<256x128xbf16, #tpu.memory_space<vmem>>, %arg6: memref<1x128xf32, #tpu.memory_space<vmem>>, %arg7: memref<256x128xbf16, #tpu.memory_space<vmem>>, %arg8: memref<1x128xf32, #tpu.memory_space<vmem>>, %arg9: memref<128x128xf32, #tpu.memory_space<vmem>>, %arg10: memref<128x256xbf16, #tpu.memory_space<vmem>>) attributes {dimension_semantics = [], scalar_prefetch = 0 : i64, scratch_operands = 1 : i64, tpu.core_type = #tpu.core_type<tc>} {
    %c0 = arith.constant 0 : index
    %c0_0 = arith.constant 0 : index
    %0 = vector.load %arg2[%c0, %c0_0] : memref<128x128xbf16, #tpu.memory_space<vmem>>, vector<128x128xbf16>
    %c0_1 = arith.constant 0 : index
    %c0_2 = arith.constant 0 : index
    %1 = vector.load %arg3[%c0_1, %c0_2] : memref<256x128xbf16, #tpu.memory_space<vmem>>, vector<256x128xbf16>
    %c0_3 = arith.constant 0 : index
    %c0_4 = arith.constant 0 : index
    %2 = vector.load %arg4[%c0_3, %c0_4] : memref<1x128xf32, #tpu.memory_space<vmem>>, vector<1x128xf32>
    %c0_5 = arith.constant 0 : index
    %c0_6 = arith.constant 0 : index
    %3 = vector.load %arg0[%c0_5, %c0_6] : memref<128x128xbf16, #tpu.memory_space<vmem>>, vector<128x128xbf16>
    %cst = arith.constant dense<0.000000e+00> : vector<128x128xf32>
    %4 = tpu.matmul %3, %0, %cst {dimension_numbers = #tpu.dot_dimension_numbers<[1], [0], [0], [1], [0, 0, 1, 1], [], []>} : vector<128x128xbf16>, vector<128x128xbf16>, vector<128x128xf32> -> vector<128x128xf32>
    %c0_7 = arith.constant 0 : index
    %c0_8 = arith.constant 0 : index
    %5 = vector.load %arg1[%c0_7, %c0_8] : memref<128x1xf32, #tpu.memory_space<vmem>>, vector<128x1xf32>
    %6 = vector.broadcast %5 : vector<128x1xf32> to vector<128x128xf32>
    %7 = arith.mulf %6, %4 : vector<128x128xf32>
    %8 = arith.truncf %7 : vector<128x128xf32> to vector<128x128xbf16>
    %c0_9 = arith.constant 0 : index
    %c0_10 = arith.constant 0 : index
    %9 = vector.load %arg10[%c0_9, %c0_10] : memref<128x256xbf16, #tpu.memory_space<vmem>>, vector<128x128xbf16>
    tpu.vector_store %arg10[%c0_9, %c0_10], %0 {strides = array<i32>} : memref<128x256xbf16, #tpu.memory_space<vmem>>, vector<128x128xbf16>,
    %c0_11 = arith.constant 0 : index
    %c128 = arith.constant 128 : index
    %10 = vector.load %arg10[%c0_11, %c128] : memref<128x256xbf16, #tpu.memory_space<vmem>>, vector<128x128xbf16>
    tpu.vector_store %arg10[%c0_11, %c128], %8 {strides = array<i32>} : memref<128x256xbf16, #tpu.memory_space<vmem>>, vector<128x128xbf16>,
    %c0_12 = arith.constant 0 : index
    %c0_13 = arith.constant 0 : index
    %11 = vector.load %arg10[%c0_12, %c0_13] : memref<128x256xbf16, #tpu.memory_space<vmem>>, vector<128x256xbf16>
    %cst_14 = arith.constant dense<0.000000e+00> : vector<128x128xf32>
    %12 = tpu.matmul %11, %1, %cst_14 {dimension_numbers = #tpu.dot_dimension_numbers<[1], [0], [0], [1], [0, 0, 1, 1], [], []>} : vector<128x256xbf16>, vector<256x128xbf16>, vector<128x128xf32> -> vector<128x128xf32>
    %13 = vector.broadcast %2 : vector<1x128xf32> to vector<128x128xf32>
    %14 = arith.addf %12, %13 : vector<128x128xf32>
    %cst_15 = arith.constant 0.000000e+00 : f32
    %15 = vector.broadcast %cst_15 : f32 to vector<128x128xf32>
    %16 = arith.maximumf %14, %15 : vector<128x128xf32>
    %17 = arith.truncf %16 : vector<128x128xf32> to vector<128x128xbf16>
    %c0_16 = arith.constant 0 : index
    %c0_17 = arith.constant 0 : index
    %18 = vector.load %arg5[%c0_16, %c0_17] : memref<256x128xbf16, #tpu.memory_space<vmem>>, vector<256x128xbf16>
    %c0_18 = arith.constant 0 : index
    %c0_19 = arith.constant 0 : index
    %19 = vector.load %arg6[%c0_18, %c0_19] : memref<1x128xf32, #tpu.memory_space<vmem>>, vector<1x128xf32>
    %c0_20 = arith.constant 0 : index
    %c0_21 = arith.constant 0 : index
    %20 = vector.load %arg0[%c0_20, %c0_21] : memref<128x128xbf16, #tpu.memory_space<vmem>>, vector<128x128xbf16>
    %cst_22 = arith.constant dense<0.000000e+00> : vector<128x128xf32>
    %21 = tpu.matmul %20, %17, %cst_22 {dimension_numbers = #tpu.dot_dimension_numbers<[1], [0], [0], [1], [0, 0, 1, 1], [], []>} : vector<128x128xbf16>, vector<128x128xbf16>, vector<128x128xf32> -> vector<128x128xf32>
    %c0_23 = arith.constant 0 : index
    %c0_24 = arith.constant 0 : index
    %22 = vector.load %arg1[%c0_23, %c0_24] : memref<128x1xf32, #tpu.memory_space<vmem>>, vector<128x1xf32>
    %23 = vector.broadcast %22 : vector<128x1xf32> to vector<128x128xf32>
    %24 = arith.mulf %23, %21 : vector<128x128xf32>
    %25 = arith.truncf %24 : vector<128x128xf32> to vector<128x128xbf16>
    %c0_25 = arith.constant 0 : index
    %c0_26 = arith.constant 0 : index
    %26 = vector.load %arg10[%c0_25, %c0_26] : memref<128x256xbf16, #tpu.memory_space<vmem>>, vector<128x128xbf16>
    tpu.vector_store %arg10[%c0_25, %c0_26], %17 {strides = array<i32>} : memref<128x256xbf16, #tpu.memory_space<vmem>>, vector<128x128xbf16>,
    %c0_27 = arith.constant 0 : index
    %c128_28 = arith.constant 128 : index
    %27 = vector.load %arg10[%c0_27, %c128_28] : memref<128x256xbf16, #tpu.memory_space<vmem>>, vector<128x128xbf16>
    tpu.vector_store %arg10[%c0_27, %c128_28], %25 {strides = array<i32>} : memref<128x256xbf16, #tpu.memory_space<vmem>>, vector<128x128xbf16>,
    %c0_29 = arith.constant 0 : index
    %c0_30 = arith.constant 0 : index
    %28 = vector.load %arg10[%c0_29, %c0_30] : memref<128x256xbf16, #tpu.memory_space<vmem>>, vector<128x256xbf16>
    %cst_31 = arith.constant dense<0.000000e+00> : vector<128x128xf32>
    %29 = tpu.matmul %28, %18, %cst_31 {dimension_numbers = #tpu.dot_dimension_numbers<[1], [0], [0], [1], [0, 0, 1, 1], [], []>} : vector<128x256xbf16>, vector<256x128xbf16>, vector<128x128xf32> -> vector<128x128xf32>
    %30 = vector.broadcast %19 : vector<1x128xf32> to vector<128x128xf32>
    %31 = arith.addf %29, %30 : vector<128x128xf32>
    %cst_32 = arith.constant 0.000000e+00 : f32
    %32 = vector.broadcast %cst_32 : f32 to vector<128x128xf32>
    %33 = arith.maximumf %31, %32 : vector<128x128xf32>
    %34 = arith.truncf %33 : vector<128x128xf32> to vector<128x128xbf16>
    %c0_33 = arith.constant 0 : index
    %c0_34 = arith.constant 0 : index
    %35 = vector.load %arg7[%c0_33, %c0_34] : memref<256x128xbf16, #tpu.memory_space<vmem>>, vector<256x128xbf16>
    %c0_35 = arith.constant 0 : index
    %c0_36 = arith.constant 0 : index
    %36 = vector.load %arg8[%c0_35, %c0_36] : memref<1x128xf32, #tpu.memory_space<vmem>>, vector<1x128xf32>
    %c0_37 = arith.constant 0 : index
    %c0_38 = arith.constant 0 : index
    %37 = vector.load %arg0[%c0_37, %c0_38] : memref<128x128xbf16, #tpu.memory_space<vmem>>, vector<128x128xbf16>
    %cst_39 = arith.constant dense<0.000000e+00> : vector<128x128xf32>
    %38 = tpu.matmul %37, %34, %cst_39 {dimension_numbers = #tpu.dot_dimension_numbers<[1], [0], [0], [1], [0, 0, 1, 1], [], []>} : vector<128x128xbf16>, vector<128x128xbf16>, vector<128x128xf32> -> vector<128x128xf32>
    %c0_40 = arith.constant 0 : index
    %c0_41 = arith.constant 0 : index
    %39 = vector.load %arg1[%c0_40, %c0_41] : memref<128x1xf32, #tpu.memory_space<vmem>>, vector<128x1xf32>
    %40 = vector.broadcast %39 : vector<128x1xf32> to vector<128x128xf32>
    %41 = arith.mulf %40, %38 : vector<128x128xf32>
    %42 = arith.truncf %41 : vector<128x128xf32> to vector<128x128xbf16>
    %c0_42 = arith.constant 0 : index
    %c0_43 = arith.constant 0 : index
    %43 = vector.load %arg10[%c0_42, %c0_43] : memref<128x256xbf16, #tpu.memory_space<vmem>>, vector<128x128xbf16>
    tpu.vector_store %arg10[%c0_42, %c0_43], %34 {strides = array<i32>} : memref<128x256xbf16, #tpu.memory_space<vmem>>, vector<128x128xbf16>,
    %c0_44 = arith.constant 0 : index
    %c128_45 = arith.constant 128 : index
    %44 = vector.load %arg10[%c0_44, %c128_45] : memref<128x256xbf16, #tpu.memory_space<vmem>>, vector<128x128xbf16>
    tpu.vector_store %arg10[%c0_44, %c128_45], %42 {strides = array<i32>} : memref<128x256xbf16, #tpu.memory_space<vmem>>, vector<128x128xbf16>,
    %c0_46 = arith.constant 0 : index
    %c0_47 = arith.constant 0 : index
    %45 = vector.load %arg10[%c0_46, %c0_47] : memref<128x256xbf16, #tpu.memory_space<vmem>>, vector<128x256xbf16>
    %cst_48 = arith.constant dense<0.000000e+00> : vector<128x128xf32>
    %46 = tpu.matmul %45, %35, %cst_48 {dimension_numbers = #tpu.dot_dimension_numbers<[1], [0], [0], [1], [0, 0, 1, 1], [], []>} : vector<128x256xbf16>, vector<256x128xbf16>, vector<128x128xf32> -> vector<128x128xf32>
    %47 = vector.broadcast %36 : vector<1x128xf32> to vector<128x128xf32>
    %48 = arith.addf %46, %47 : vector<128x128xf32>
    %cst_49 = arith.constant dense<0xFF800000> : vector<128xf32>
    %49 = vector.multi_reduction <maximumf>, %48, %cst_49 [1] : vector<128x128xf32> to vector<128xf32>
    %50 = vector.shape_cast %49 : vector<128xf32> to vector<128x1xf32>
    %51 = vector.broadcast %50 : vector<128x1xf32> to vector<128x128xf32>
    %52 = arith.subf %48, %51 : vector<128x128xf32>
    %53 = math.exp %52 : vector<128x128xf32>
    %cst_50 = arith.constant dense<0.000000e+00> : vector<128xf32>
    %54 = vector.multi_reduction <add>, %53, %cst_50 [1] : vector<128x128xf32> to vector<128xf32>
    %55 = vector.shape_cast %54 : vector<128xf32> to vector<128x1xf32>
    %56 = math.log %55 : vector<128x1xf32>
    %57 = vector.broadcast %56 : vector<128x1xf32> to vector<128x128xf32>
    %58 = arith.subf %52, %57 : vector<128x128xf32>
    %c0_51 = arith.constant 0 : index
    %c0_52 = arith.constant 0 : index
    %59 = vector.load %arg9[%c0_51, %c0_52] : memref<128x128xf32, #tpu.memory_space<vmem>>, vector<128x128xf32>
    tpu.vector_store %arg9[%c0_51, %c0_52], %58 {strides = array<i32>} : memref<128x128xf32, #tpu.memory_space<vmem>>, vector<128x128xf32>,
    return
  }
}

</mosaic_0001>

<llo_original>
// kernel: tpu_custom_call.1
$region0: #{tpu_custom_call.1}
  #allocation0 [shape = 'u32[]', space=smem, size = 0x4, offset = 0x4, fixed_abs, tag = 'smem constant byte address 0x4 - core index']
  #allocation1 [shape = 'u32[72,128]{1,0:T(1,128)}', space=vmem, size = 0x9000, scoped, tag = 'internal scratch']
  #allocation2 [shape = 'bf16[128,256]{1,0:T(8,128)(2,1)}', space=vmem, size = 0x10000, scoped, tag = 'scratch operand']
  %s0 = inlined_call_operand.hbm [shape: bf16[128,128], index: 0, kind: input, shape index: {}]
  %s1 = inlined_call_operand.vmem [shape: f32[128,1], index: 1, kind: input, shape index: {}]
  %s2 = inlined_call_operand.hbm [shape: bf16[128,128], index: 2, kind: input, shape index: {}]
  %s3 = inlined_call_operand.vmem [shape: bf16[256,128], index: 3, kind: input, shape index: {}]
  %s4 = inlined_call_operand.vmem [shape: f32[1,128], index: 4, kind: input, shape index: {}]
  %s5 = inlined_call_operand.hbm [shape: bf16[256,128], index: 5, kind: input, shape index: {}]
  %s6 = inlined_call_operand.vmem [shape: f32[1,128], index: 6, kind: input, shape index: {}]
  %s7 = inlined_call_operand.hbm [shape: bf16[256,128], index: 7, kind: input, shape index: {}]
  %s8 = inlined_call_operand.vmem [shape: f32[1,128], index: 8, kind: input, shape index: {}]
  %s9 = inlined_call_operand.hbm [shape: f32[128,128], index: 9, kind: output, shape index: {}]
  %s10 = sld [smem:[#allocation0]]
  $region62: #{tpu_custom_call.1} parent=0
    _
  %s12 = ssub.s32 1, %s10
  %s13 = scalar_select 0, %s12, %s10
  $region1: #{tpu_custom_call.1} parent=0
    #allocation3 [shape = 'u8[32768]{0}', space=vmem, size = 0x8000, scoped, tag = 'input window, operand 0, single buffered']
    #allocation4 [shape = 's32[1]{0}', space=sflag, size = 0x4, scoped, tag = 'scoped memory for tpu_custom_call.1']
    #allocation5 [shape = 's32[1]{0}', space=sflag, size = 0x4, scoped, tag = 'scoped memory for tpu_custom_call.1']
    #allocation6 [shape = 'u8[32768]{0}', space=vmem, size = 0x8000, scoped, tag = 'input window, operand 2, single buffered']
    #allocation7 [shape = 's32[1]{0}', space=sflag, size = 0x4, scoped, tag = 'scoped memory for tpu_custom_call.1']
    #allocation8 [shape = 'u8[65536]{0}', space=vmem, size = 0x10000, scoped, tag = 'input window, operand 5, single buffered']
    #allocation9 [shape = 'u8[65536]{0}', space=vmem, size = 0x10000, scoped, tag = 'input window, operand 7, single buffered']
    #allocation10 [shape = 's32[1]{0}', space=sflag, size = 0x4, scoped, tag = 'scoped memory for tpu_custom_call.1']
    #allocation11 [shape = 'u8[65536]{0}', space=vmem, size = 0x10000, scoped, tag = 'output window, operand 0, single buffered']
    %14 = vsyncpa [#allocation4], 0
    %15 = vsyncpa [#allocation7], 0
    %16 = vsyncpa [#allocation10], 0
    %17 = vsyncpa [#allocation5], 0
    // Predicated region
    $region2: #{tpu_custom_call.1} parent=1 // pred_check
      _
    $region3: #{tpu_custom_call.1} parent=1 // pred_check_branch
      %19 = sbr.rel (0) target = $region5
    $region4: #{tpu_custom_call.1} parent=1 // pred_region
      %21 = vsyncadd [#allocation4], 0
      %s22 = sshll.u32 %s0, 4
      %s23 = int_to_ptr.hbm [resolvable:$true] %s22
      %s24 = sshll.u32 [#allocation3], 4
      %s25 = int_to_ptr.vmem [resolvable:$true] %s24
      %30 = dma.hbm_to_vmem [thread:$0]  %s23, 1024, %s25, [#allocation4], 64, 64, 4
    $region5: #{tpu_custom_call.1} parent=1 // pred_fallthru
      _
    // Predicated region
    $region6: #{tpu_custom_call.1} parent=1 // pred_check
      _
    $region7: #{tpu_custom_call.1} parent=1 // pred_check_branch
      %32 = sbr.rel (0) target = $region9
    $region8: #{tpu_custom_call.1} parent=1 // pred_region
      _
    $region9: #{tpu_custom_call.1} parent=1 // pred_fallthru
      _
    // Predicated region
    $region10: #{tpu_custom_call.1} parent=1 // pred_check
      _
    $region11: #{tpu_custom_call.1} parent=1 // pred_check_branch
      %34 = sbr.rel (0) target = $region13
    $region12: #{tpu_custom_call.1} parent=1 // pred_region
      %36 = vsyncadd [#allocation7], 0
      %s37 = sshll.u32 %s2, 4
      %s38 = int_to_ptr.hbm [resolvable:$true] %s37
      %s39 = sshll.u32 [#allocation6], 4
      %s40 = int_to_ptr.vmem [resolvable:$true] %s39
      %45 = dma.hbm_to_vmem [thread:$0]  %s38, 1024, %s40, [#allocation7], 64, 64, 4
    $region13: #{tpu_custom_call.1} parent=1 // pred_fallthru
      _
    // Predicated region
    $region14: #{tpu_custom_call.1} parent=1 // pred_check
      _
    $region15: #{tpu_custom_call.1} parent=1 // pred_check_branch
      %47 = sbr.rel (0) target = $region17
    $region16: #{tpu_custom_call.1} parent=1 // pred_region
      _
    $region17: #{tpu_custom_call.1} parent=1 // pred_fallthru
      _
    // Predicated region
    $region18: #{tpu_custom_call.1} parent=1 // pred_check
      _
    $region19: #{tpu_custom_call.1} parent=1 // pred_check_branch
      %49 = sbr.rel (0) target = $region21
    $region20: #{tpu_custom_call.1} parent=1 // pred_region
      _
    $region21: #{tpu_custom_call.1} parent=1 // pred_fallthru
      _
    // Predicated region
    $region22: #{tpu_custom_call.1} parent=1 // pred_check
      _
    $region23: #{tpu_custom_call.1} parent=1 // pred_check_branch
      %51 = sbr.rel (0) target = $region25
    $region24: #{tpu_custom_call.1} parent=1 // pred_region
      %53 = vsyncadd [#allocation7], 0
      %s54 = sshll.u32 %s5, 4
      %s55 = int_to_ptr.hbm [resolvable:$true] %s54
      %s56 = sshll.u32 [#allocation8], 4
      %s57 = int_to_ptr.vmem [resolvable:$true] %s56
      %62 = dma.hbm_to_vmem [thread:$0]  %s55, 2048, %s57, [#allocation7], 64, 64, 4
    $region25: #{tpu_custom_call.1} parent=1 // pred_fallthru
      _
    // Predicated region
    $region26: #{tpu_custom_call.1} parent=1 // pred_check
      _
    $region27: #{tpu_custom_call.1} parent=1 // pred_check_branch
      %64 = sbr.rel (0) target = $region29
    $region28: #{tpu_custom_call.1} parent=1 // pred_region
      _
    $region29: #{tpu_custom_call.1} parent=1 // pred_fallthru
      _
    // Predicated region
    $region30: #{tpu_custom_call.1} parent=1 // pred_check
      _
    $region31: #{tpu_custom_call.1} parent=1 // pred_check_branch
      %66 = sbr.rel (0) target = $region33
    $region32: #{tpu_custom_call.1} parent=1 // pred_region
      %68 = vsyncadd [#allocation10], 0
      %s69 = sshll.u32 %s7, 4
      %s70 = int_to_ptr.hbm [resolvable:$true] %s69
      %s71 = sshll.u32 [#allocation9], 4
      %s72 = int_to_ptr.vmem [resolvable:$true] %s71
      %77 = dma.hbm_to_vmem [thread:$0]  %s70, 2048, %s72, [#allocation10], 64, 64, 4
    $region33: #{tpu_custom_call.1} parent=1 // pred_fallthru
      _
    // Predicated region
    $region34: #{tpu_custom_call.1} parent=1 // pred_check
      _
    $region35: #{tpu_custom_call.1} parent=1 // pred_check_branch
      %79 = sbr.rel (0) target = $region37
    $region36: #{tpu_custom_call.1} parent=1 // pred_region
      _
    $region37: #{tpu_custom_call.1} parent=1 // pred_fallthru
      _
    // Predicated region
    $region38: #{tpu_custom_call.1} parent=1 // pred_check
      _
    $region39: #{tpu_custom_call.1} parent=1 // pred_check_branch
      %81 = sbr.rel (0) target = $region41
    $region40: #{tpu_custom_call.1} parent=1 // pred_region
      %83 = dma.done [#allocation4], 1024
    $region41: #{tpu_custom_call.1} parent=1 // pred_fallthru
      _
    // Predicated region
    $region42: #{tpu_custom_call.1} parent=1 // pred_check
      _
    $region43: #{tpu_custom_call.1} parent=1 // pred_check_branch
      %85 = sbr.rel (0) target = $region45
    $region44: #{tpu_custom_call.1} parent=1 // pred_region
      %87 = dma.done [#allocation7], 1024
    $region45: #{tpu_custom_call.1} parent=1 // pred_fallthru
      _
    // Predicated region
    $region46: #{tpu_custom_call.1} parent=1 // pred_check
      _
    $region47: #{tpu_custom_call.1} parent=1 // pred_check_branch
      %89 = sbr.rel (0) target = $region49
    $region48: #{tpu_custom_call.1} parent=1 // pred_region
      %91 = dma.done [#allocation7], 2048
    $region49: #{tpu_custom_call.1} parent=1 // pred_fallthru
      _
    // Predicated region
    $region50: #{tpu_custom_call.1} parent=1 // pred_check
      _
    $region51: #{tpu_custom_call.1} parent=1 // pred_check_branch
      %93 = sbr.rel (0) target = $region53
    $region52: #{tpu_custom_call.1} parent=1 // pred_region
      %95 = dma.done [#allocation10], 2048
    $region53: #{tpu_custom_call.1} parent=1 // pred_fallthru
      _
    %v96 = vld [vmem:[#allocation6] sm:$0xf]
    %v97 = vld [vmem:[#allocation6 + $0x4] sm:$0xf]
    %v98 = vld [vmem:[#allocation6 + $0x8] sm:$0xf]
    %v99 = vld [vmem:[#allocation6 + $0xc] sm:$0xf]
    %v100 = vld [vmem:[#allocation6 + $0x10] sm:$0xf]
    %v101 = vld [vmem:[#allocation6 + $0x14] sm:$0xf]
    %v102 = vld [vmem:[#allocation6 + $0x18] sm:$0xf]
    %v103 = vld [vmem:[#allocation6 + $0x1c] sm:$0xf]
    %v104 = vld [vmem:[#allocation6 + $0x20] sm:$0xf]
    %v105 = vld [vmem:[#allocation6 + $0x24] sm:$0xf]
    %v106 = vld [vmem:[#allocation6 + $0x28] sm:$0xf]
    %v107 = vld [vmem:[#allocation6 + $0x2c] sm:$0xf]
    %v108 = vld [vmem:[#allocation6 + $0x30] sm:$0xf]
    %v109 = vld [vmem:[#allocation6 + $0x34] sm:$0xf]
    %v110 = vld [vmem:[#allocation6 + $0x38] sm:$0xf]
    %v111 = vld [vmem:[#allocation6 + $0x3c] sm:$0xf]
    %v112 = vld [vmem:[%s3] sm:$0xf]
    %v113 = vld [vmem:[%s3 + $0x4] sm:$0xf]
    %v114 = vld [vmem:[%s3 + $0x8] sm:$0xf]
    %v115 = vld [vmem:[%s3 + $0xc] sm:$0xf]
    %v116 = vld [vmem:[%s3 + $0x10] sm:$0xf]
    %v117 = vld [vmem:[%s3 + $0x14] sm:$0xf]
    %v118 = vld [vmem:[%s3 + $0x18] sm:$0xf]
    %v119 = vld [vmem:[%s3 + $0x1c] sm:$0xf]
    %v120 = vld [vmem:[%s3 + $0x20] sm:$0xf]
    %v121 = vld [vmem:[%s3 + $0x24] sm:$0xf]
    %v122 = vld [vmem:[%s3 + $0x28] sm:$0xf]
    %v123 = vld [vmem:[%s3 + $0x2c] sm:$0xf]
    %v124 = vld [vmem:[%s3 + $0x30] sm:$0xf]
    %v125 = vld [vmem:[%s3 + $0x34] sm:$0xf]
    %v126 = vld [vmem:[%s3 + $0x38] sm:$0xf]
    %v127 = vld [vmem:[%s3 + $0x3c] sm:$0xf]
    %v128 = vld [vmem:[%s3 + $0x40] sm:$0xf]
    %v129 = vld [vmem:[%s3 + $0x44] sm:$0xf]
    %v130 = vld [vmem:[%s3 + $0x48] sm:$0xf]
    %v131 = vld [vmem:[%s3 + $0x4c] sm:$0xf]
    %v132 = vld [vmem:[%s3 + $0x50] sm:$0xf]
    %v133 = vld [vmem:[%s3 + $0x54] sm:$0xf]
    %v134 = vld [vmem:[%s3 + $0x58] sm:$0xf]
    %v135 = vld [vmem:[%s3 + $0x5c] sm:$0xf]
    %v136 = vld [vmem:[%s3 + $0x60] sm:$0xf]
    %v137 = vld [vmem:[%s3 + $0x64] sm:$0xf]
    %v138 = vld [vmem:[%s3 + $0x68] sm:$0xf]
    %v139 = vld [vmem:[%s3 + $0x6c] sm:$0xf]
    %v140 = vld [vmem:[%s3 + $0x70] sm:$0xf]
    %v141 = vld [vmem:[%s3 + $0x74] sm:$0xf]
    %v142 = vld [vmem:[%s3 + $0x78] sm:$0xf]
    %v143 = vld [vmem:[%s3 + $0x7c] sm:$0xf]
    %v144 = vld [vmem:[%s4] sm:$0x1]
    %v145 = vld [vmem:[#allocation3] sm:$0xf]
    %v146 = vld [vmem:[#allocation3 + $0x4] sm:$0xf]
    %v147 = vld [vmem:[#allocation3 + $0x8] sm:$0xf]
    %v148 = vld [vmem:[#allocation3 + $0xc] sm:$0xf]
    %v149 = vld [vmem:[#allocation3 + $0x10] sm:$0xf]
    %v150 = vld [vmem:[#allocation3 + $0x14] sm:$0xf]
    %v151 = vld [vmem:[#allocation3 + $0x18] sm:$0xf]
    %v152 = vld [vmem:[#allocation3 + $0x1c] sm:$0xf]
    %v153 = vld [vmem:[#allocation3 + $0x20] sm:$0xf]
    %v154 = vld [vmem:[#allocation3 + $0x24] sm:$0xf]
    %v155 = vld [vmem:[#allocation3 + $0x28] sm:$0xf]
    %v156 = vld [vmem:[#allocation3 + $0x2c] sm:$0xf]
    %v157 = vld [vmem:[#allocation3 + $0x30] sm:$0xf]
    %v158 = vld [vmem:[#allocation3 + $0x34] sm:$0xf]
    %v159 = vld [vmem:[#allocation3 + $0x38] sm:$0xf]
    %v160 = vld [vmem:[#allocation3 + $0x3c] sm:$0xf]
    %v177 = vunpack.c.l.b16 %v145
    %v178 = vunpack.c.l.b16 %v146
    %v179 = vunpack.c.l.b16 %v147
    %v180 = vunpack.c.l.b16 %v148
    %v181 = vunpack.c.l.b16 %v149
    %v182 = vunpack.c.l.b16 %v150
    %v183 = vunpack.c.l.b16 %v151
    %v184 = vunpack.c.l.b16 %v152
    %v185 = vunpack.c.l.b16 %v153
    %v186 = vunpack.c.l.b16 %v154
    %v187 = vunpack.c.l.b16 %v155
    %v188 = vunpack.c.l.b16 %v156
    %v189 = vunpack.c.l.b16 %v157
    %v190 = vunpack.c.l.b16 %v158
    %v191 = vunpack.c.l.b16 %v159
    %v192 = vunpack.c.l.b16 %v160
    %v193 = vpack.c.b16 %v178, %v177
    %v194 = vpack.c.b16 %v180, %v179
    %v195 = vpack.c.b16 %v182, %v181
    %v196 = vpack.c.b16 %v184, %v183
    %v197 = vpack.c.b16 %v186, %v185
    %v198 = vpack.c.b16 %v188, %v187
    %v199 = vpack.c.b16 %v190, %v189
    %v200 = vpack.c.b16 %v192, %v191
    %v225 = vunpack.c.l.b16 %v96
    %v226 = vunpack.c.l.b16 %v97
    %v227 = vunpack.c.l.b16 %v98
    %v228 = vunpack.c.l.b16 %v99
    %v229 = vunpack.c.l.b16 %v100
    %v230 = vunpack.c.l.b16 %v101
    %v231 = vunpack.c.l.b16 %v102
    %v232 = vunpack.c.l.b16 %v103
    %v233 = vunpack.c.l.b16 %v104
    %v234 = vunpack.c.l.b16 %v105
    %v235 = vunpack.c.l.b16 %v106
    %v236 = vunpack.c.l.b16 %v107
    %v237 = vunpack.c.l.b16 %v108
    %v238 = vunpack.c.l.b16 %v109
    %v239 = vunpack.c.l.b16 %v110
    %v240 = vunpack.c.l.b16 %v111
    %v241 = vpack.c.b16 %v226, %v225
    %v242 = vpack.c.b16 %v228, %v227
    %v243 = vpack.c.b16 %v230, %v229
    %v244 = vpack.c.b16 %v232, %v231
    %v245 = vpack.c.b16 %v234, %v233
    %v246 = vpack.c.b16 %v236, %v235
    %v247 = vpack.c.b16 %v238, %v237
    %v248 = vpack.c.b16 %v240, %v239
    %257 = vmatpush.bf16.msra.mxu0 %v248
    %258 = vmatpush.bf16.msra.mxu0 %v247
    %259 = vmatpush.bf16.msra.mxu0 %v246
    %260 = vmatpush.bf16.msra.mxu0 %v245
    %261 = vmatpush.bf16.msra.mxu0 %v244
    %262 = vmatpush.bf16.msra.mxu0 %v243
    %263 = vmatpush.bf16.msra.mxu0 %v242
    %264 = vmatpush.bf16.msra.mxu0 %v241
    %265 = vmatmul.bf16.gmra.mxu0 %v193
    %v266 = vpop.f32.mrf.mxu0
    %v267 = vadd.f32 0.0, %v266
    %v268 = vpop.f32.mrf.mxu0
    %v269 = vadd.f32 0.0, %v268
    %270 = vmatmul.bf16.gmra.mxu0 %v194
    %v271 = vpop.f32.mrf.mxu0
    %v272 = vadd.f32 0.0, %v271
    %v273 = vpop.f32.mrf.mxu0
    %v274 = vadd.f32 0.0, %v273
    %275 = vmatmul.bf16.gmra.mxu0 %v195
    %v276 = vpop.f32.mrf.mxu0
    %v277 = vadd.f32 0.0, %v276
    %v278 = vpop.f32.mrf.mxu0
    %v279 = vadd.f32 0.0, %v278
    %280 = vmatmul.bf16.gmra.mxu0 %v196
    %v281 = vpop.f32.mrf.mxu0
    %v282 = vadd.f32 0.0, %v281
    %v283 = vpop.f32.mrf.mxu0
    %v284 = vadd.f32 0.0, %v283
    %285 = vmatmul.bf16.gmra.mxu0 %v197
    %v286 = vpop.f32.mrf.mxu0
    %v287 = vadd.f32 0.0, %v286
    %v288 = vpop.f32.mrf.mxu0
    %v289 = vadd.f32 0.0, %v288
    %290 = vmatmul.bf16.gmra.mxu0 %v198
    %v291 = vpop.f32.mrf.mxu0
    %v292 = vadd.f32 0.0, %v291
    %v293 = vpop.f32.mrf.mxu0
    %v294 = vadd.f32 0.0, %v293
    %295 = vmatmul.bf16.gmra.mxu0 %v199
    %v296 = vpop.f32.mrf.mxu0
    %v297 = vadd.f32 0.0, %v296
    %v298 = vpop.f32.mrf.mxu0
    %v299 = vadd.f32 0.0, %v298
    %300 = vmatmul.bf16.gmra.mxu0 %v200
    %v301 = vpop.f32.mrf.mxu0
    %v302 = vadd.f32 0.0, %v301
    %v303 = vpop.f32.mrf.mxu0
    %v304 = vadd.f32 0.0, %v303
    %305 = vdwg.mxu0
    %v306 = vld [vmem:[%s1] sm:$0xff]
    %v307 = vld [vmem:[%s1 + $0x8] sm:$0xff]
    %v308 = vld [vmem:[%s1 + $0x10] sm:$0xff]
    %v309 = vld [vmem:[%s1 + $0x18] sm:$0xff]
    %v310 = vld [vmem:[%s1 + $0x20] sm:$0xff]
    %v311 = vld [vmem:[%s1 + $0x28] sm:$0xff]
    %v312 = vld [vmem:[%s1 + $0x30] sm:$0xff]
    %v313 = vld [vmem:[%s1 + $0x38] sm:$0xff]
    %v314 = vld [vmem:[%s1 + $0x40] sm:$0xff]
    %v315 = vld [vmem:[%s1 + $0x48] sm:$0xff]
    %v316 = vld [vmem:[%s1 + $0x50] sm:$0xff]
    %v317 = vld [vmem:[%s1 + $0x58] sm:$0xff]
    %v318 = vld [vmem:[%s1 + $0x60] sm:$0xff]
    %v319 = vld [vmem:[%s1 + $0x68] sm:$0xff]
    %v320 = vld [vmem:[%s1 + $0x70] sm:$0xff]
    %v321 = vld [vmem:[%s1 + $0x78] sm:$0xff]
    %323 = vset.pattern.permute.xlu0 0
    %324 = vperm.xlu0 %323, %v306
    %v325 = vpop.permute.xlu0 %324
    %328 = vset.pattern.permute.xlu0 0
    %329 = vperm.xlu0 %328, %v307
    %v330 = vpop.permute.xlu0 %329
    %333 = vset.pattern.permute.xlu0 0
    %334 = vperm.xlu0 %333, %v308
    %v335 = vpop.permute.xlu0 %334
    %338 = vset.pattern.permute.xlu0 0
    %339 = vperm.xlu0 %338, %v309
    %v340 = vpop.permute.xlu0 %339
    %343 = vset.pattern.permute.xlu0 0
    %344 = vperm.xlu0 %343, %v310
    %v345 = vpop.permute.xlu0 %344
    %348 = vset.pattern.permute.xlu0 0
    %349 = vperm.xlu0 %348, %v311
    %v350 = vpop.permute.xlu0 %349
    %353 = vset.pattern.permute.xlu0 0
    %354 = vperm.xlu0 %353, %v312
    %v355 = vpop.permute.xlu0 %354
    %358 = vset.pattern.permute.xlu0 0
    %359 = vperm.xlu0 %358, %v313
    %v360 = vpop.permute.xlu0 %359
    %363 = vset.pattern.permute.xlu0 0
    %364 = vperm.xlu0 %363, %v314
    %v365 = vpop.permute.xlu0 %364
    %368 = vset.pattern.permute.xlu0 0
    %369 = vperm.xlu0 %368, %v315
    %v370 = vpop.permute.xlu0 %369
    %373 = vset.pattern.permute.xlu0 0
    %374 = vperm.xlu0 %373, %v316
    %v375 = vpop.permute.xlu0 %374
    %378 = vset.pattern.permute.xlu0 0
    %379 = vperm.xlu0 %378, %v317
    %v380 = vpop.permute.xlu0 %379
    %383 = vset.pattern.permute.xlu0 0
    %384 = vperm.xlu0 %383, %v318
    %v385 = vpop.permute.xlu0 %384
    %388 = vset.pattern.permute.xlu0 0
    %389 = vperm.xlu0 %388, %v319
    %v390 = vpop.permute.xlu0 %389
    %393 = vset.pattern.permute.xlu0 0
    %394 = vperm.xlu0 %393, %v320
    %v395 = vpop.permute.xlu0 %394
    %398 = vset.pattern.permute.xlu0 0
    %399 = vperm.xlu0 %398, %v321
    %v400 = vpop.permute.xlu0 %399
    %v402 = vmul.f32 %v325, %v267
    %v403 = vmul.f32 %v330, %v269
    %v404 = vmul.f32 %v335, %v272
    %v405 = vmul.f32 %v340, %v274
    %v406 = vmul.f32 %v345, %v277
    %v407 = vmul.f32 %v350, %v279
    %v408 = vmul.f32 %v355, %v282
    %v409 = vmul.f32 %v360, %v284
    %v410 = vmul.f32 %v365, %v287
    %v411 = vmul.f32 %v370, %v289
    %v412 = vmul.f32 %v375, %v292
    %v413 = vmul.f32 %v380, %v294
    %v414 = vmul.f32 %v385, %v297
    %v415 = vmul.f32 %v390, %v299
    %v416 = vmul.f32 %v395, %v302
    %v417 = vmul.f32 %v400, %v304
    %v418 = vpack.c.bf16 %v402, %v402
    %v419 = vpack.c.bf16 %v403, %v403
    %v420 = vpack.c.bf16 %v404, %v404
    %v421 = vpack.c.bf16 %v405, %v405
    %v422 = vpack.c.bf16 %v406, %v406
    %v423 = vpack.c.bf16 %v407, %v407
    %v424 = vpack.c.bf16 %v408, %v408
    %v425 = vpack.c.bf16 %v409, %v409
    %v426 = vpack.c.bf16 %v410, %v410
    %v427 = vpack.c.bf16 %v411, %v411
    %v428 = vpack.c.bf16 %v412, %v412
    %v429 = vpack.c.bf16 %v413, %v413
    %v430 = vpack.c.bf16 %v414, %v414
    %v431 = vpack.c.bf16 %v415, %v415
    %v432 = vpack.c.bf16 %v416, %v416
    %v433 = vpack.c.bf16 %v417, %v417
    %434 = vst [vmem:[#allocation2] sm:$0xf] %v96
    %435 = vst [vmem:[#allocation2 + $0x8] sm:$0xf] %v97
    %436 = vst [vmem:[#allocation2 + $0x10] sm:$0xf] %v98
    %437 = vst [vmem:[#allocation2 + $0x18] sm:$0xf] %v99
    %438 = vst [vmem:[#allocation2 + $0x20] sm:$0xf] %v100
    %439 = vst [vmem:[#allocation2 + $0x28] sm:$0xf] %v101
    %440 = vst [vmem:[#allocation2 + $0x30] sm:$0xf] %v102
    %441 = vst [vmem:[#allocation2 + $0x38] sm:$0xf] %v103
    %442 = vst [vmem:[#allocation2 + $0x40] sm:$0xf] %v104
    %443 = vst [vmem:[#allocation2 + $0x48] sm:$0xf] %v105
    %444 = vst [vmem:[#allocation2 + $0x50] sm:$0xf] %v106
    %445 = vst [vmem:[#allocation2 + $0x58] sm:$0xf] %v107
    %446 = vst [vmem:[#allocation2 + $0x60] sm:$0xf] %v108
    %447 = vst [vmem:[#allocation2 + $0x68] sm:$0xf] %v109
    %448 = vst [vmem:[#allocation2 + $0x70] sm:$0xf] %v110
    %449 = vst [vmem:[#allocation2 + $0x78] sm:$0xf] %v111
    %450 = vst [vmem:[#allocation2 + $0x4] sm:$0xf] %v418
    %451 = vst [vmem:[#allocation2 + $0xc] sm:$0xf] %v419
    %452 = vst [vmem:[#allocation2 + $0x14] sm:$0xf] %v420
    %453 = vst [vmem:[#allocation2 + $0x1c] sm:$0xf] %v421
    %454 = vst [vmem:[#allocation2 + $0x24] sm:$0xf] %v422
    %455 = vst [vmem:[#allocation2 + $0x2c] sm:$0xf] %v423
    %456 = vst [vmem:[#allocation2 + $0x34] sm:$0xf] %v424
    %457 = vst [vmem:[#allocation2 + $0x3c] sm:$0xf] %v425
    %458 = vst [vmem:[#allocation2 + $0x44] sm:$0xf] %v426
    %459 = vst [vmem:[#allocation2 + $0x4c] sm:$0xf] %v427
    %460 = vst [vmem:[#allocation2 + $0x54] sm:$0xf] %v428
    %461 = vst [vmem:[#allocation2 + $0x5c] sm:$0xf] %v429
    %462 = vst [vmem:[#allocation2 + $0x64] sm:$0xf] %v430
    %463 = vst [vmem:[#allocation2 + $0x6c] sm:$0xf] %v431
    %464 = vst [vmem:[#allocation2 + $0x74] sm:$0xf] %v432
    %465 = vst [vmem:[#allocation2 + $0x7c] sm:$0xf] %v433
    %v466 = vld [vmem:[#allocation2] sm:$0xff]
    %v467 = vld [vmem:[#allocation2 + $0x8] sm:$0xff]
    %v468 = vld [vmem:[#allocation2 + $0x10] sm:$0xff]
    %v469 = vld [vmem:[#allocation2 + $0x18] sm:$0xff]
    %v470 = vld [vmem:[#allocation2 + $0x20] sm:$0xff]
    %v471 = vld [vmem:[#allocation2 + $0x28] sm:$0xff]
    %v472 = vld [vmem:[#allocation2 + $0x30] sm:$0xff]
    %v473 = vld [vmem:[#allocation2 + $0x38] sm:$0xff]
    %v474 = vld [vmem:[#allocation2 + $0x40] sm:$0xff]
    %v475 = vld [vmem:[#allocation2 + $0x48] sm:$0xff]
    %v476 = vld [vmem:[#allocation2 + $0x50] sm:$0xff]
    %v477 = vld [vmem:[#allocation2 + $0x58] sm:$0xff]
    %v478 = vld [vmem:[#allocation2 + $0x60] sm:$0xff]
    %v479 = vld [vmem:[#allocation2 + $0x68] sm:$0xff]
    %v480 = vld [vmem:[#allocation2 + $0x70] sm:$0xff]
    %v481 = vld [vmem:[#allocation2 + $0x78] sm:$0xff]
    %v483 = vperm.slane %v144, 0
    %v501 = vunpack.c.l.b16 %v466
    %v502 = vunpack.c.h.b16 %v466
    %v503 = vunpack.c.l.b16 %v467
    %v504 = vunpack.c.h.b16 %v467
    %v505 = vunpack.c.l.b16 %v468
    %v506 = vunpack.c.h.b16 %v468
    %v507 = vunpack.c.l.b16 %v469
    %v508 = vunpack.c.h.b16 %v469
    %v509 = vunpack.c.l.b16 %v470
    %v510 = vunpack.c.h.b16 %v470
    %v511 = vunpack.c.l.b16 %v471
    %v512 = vunpack.c.h.b16 %v471
    %v513 = vunpack.c.l.b16 %v472
    %v514 = vunpack.c.h.b16 %v472
    %v515 = vunpack.c.l.b16 %v473
    %v516 = vunpack.c.h.b16 %v473
    %v517 = vunpack.c.l.b16 %v474
    %v518 = vunpack.c.h.b16 %v474
    %v519 = vunpack.c.l.b16 %v475
    %v520 = vunpack.c.h.b16 %v475
    %v521 = vunpack.c.l.b16 %v476
    %v522 = vunpack.c.h.b16 %v476
    %v523 = vunpack.c.l.b16 %v477
    %v524 = vunpack.c.h.b16 %v477
    %v525 = vunpack.c.l.b16 %v478
    %v526 = vunpack.c.h.b16 %v478
    %v527 = vunpack.c.l.b16 %v479
    %v528 = vunpack.c.h.b16 %v479
    %v529 = vunpack.c.l.b16 %v480
    %v530 = vunpack.c.h.b16 %v480
    %v531 = vunpack.c.l.b16 %v481
    %v532 = vunpack.c.h.b16 %v481
    %v533 = vpack.c.b16 %v503, %v501
    %v534 = vpack.c.b16 %v504, %v502
    %v535 = vpack.c.b16 %v507, %v505
    %v536 = vpack.c.b16 %v508, %v506
    %v537 = vpack.c.b16 %v511, %v509
    %v538 = vpack.c.b16 %v512, %v510
    %v539 = vpack.c.b16 %v515, %v513
    %v540 = vpack.c.b16 %v516, %v514
    %v541 = vpack.c.b16 %v519, %v517
    %v542 = vpack.c.b16 %v520, %v518
    %v543 = vpack.c.b16 %v523, %v521
    %v544 = vpack.c.b16 %v524, %v522
    %v545 = vpack.c.b16 %v527, %v525
    %v546 = vpack.c.b16 %v528, %v526
    %v547 = vpack.c.b16 %v531, %v529
    %v548 = vpack.c.b16 %v532, %v530
    %v597 = vunpack.c.l.b16 %v112
    %v598 = vunpack.c.l.b16 %v113
    %v599 = vunpack.c.l.b16 %v114
    %v600 = vunpack.c.l.b16 %v115
    %v601 = vunpack.c.l.b16 %v116
    %v602 = vunpack.c.l.b16 %v117
    %v603 = vunpack.c.l.b16 %v118
    %v604 = vunpack.c.l.b16 %v119
    %v605 = vunpack.c.l.b16 %v120
    %v606 = vunpack.c.l.b16 %v121
    %v607 = vunpack.c.l.b16 %v122
    %v608 = vunpack.c.l.b16 %v123
    %v609 = vunpack.c.l.b16 %v124
    %v610 = vunpack.c.l.b16 %v125
    %v611 = vunpack.c.l.b16 %v126
    %v612 = vunpack.c.l.b16 %v127
    %v613 = vunpack.c.l.b16 %v128
    %v614 = vunpack.c.l.b16 %v129
    %v615 = vunpack.c.l.b16 %v130
    %v616 = vunpack.c.l.b16 %v131
    %v617 = vunpack.c.l.b16 %v132
    %v618 = vunpack.c.l.b16 %v133
    %v619 = vunpack.c.l.b16 %v134
    %v620 = vunpack.c.l.b16 %v135
    %v621 = vunpack.c.l.b16 %v136
    %v622 = vunpack.c.l.b16 %v137
    %v623 = vunpack.c.l.b16 %v138
    %v624 = vunpack.c.l.b16 %v139
    %v625 = vunpack.c.l.b16 %v140
    %v626 = vunpack.c.l.b16 %v141
    %v627 = vunpack.c.l.b16 %v142
    %v628 = vunpack.c.l.b16 %v143
    %v629 = vpack.c.b16 %v598, %v597
    %v630 = vpack.c.b16 %v600, %v599
    %v631 = vpack.c.b16 %v602, %v601
    %v632 = vpack.c.b16 %v604, %v603
    %v633 = vpack.c.b16 %v606, %v605
    %v634 = vpack.c.b16 %v608, %v607
    %v635 = vpack.c.b16 %v610, %v609
    %v636 = vpack.c.b16 %v612, %v611
    %v637 = vpack.c.b16 %v614, %v613
    %v638 = vpack.c.b16 %v616, %v615
    %v639 = vpack.c.b16 %v618, %v617
    %v640 = vpack.c.b16 %v620, %v619
    %v641 = vpack.c.b16 %v622, %v621
    %v642 = vpack.c.b16 %v624, %v623
    %v643 = vpack.c.b16 %v626, %v625
    %v644 = vpack.c.b16 %v628, %v627
    %661 = vmatpush.bf16.msra.mxu0 %v636
    %662 = vmatpush.bf16.msra.mxu0 %v635
    %663 = vmatpush.bf16.msra.mxu0 %v634
    %664 = vmatpush.bf16.msra.mxu0 %v633
    %665 = vmatpush.bf16.msra.mxu0 %v632
    %666 = vmatpush.bf16.msra.mxu0 %v631
    %667 = vmatpush.bf16.msra.mxu0 %v630
    %668 = vmatpush.bf16.msra.mxu0 %v629
    %669 = vmatmul.bf16.gmra.mxu0 %v533
    %v670 = vpop.f32.mrf.mxu0
    %v671 = vadd.f32 %v483, %v670
    %v672 = vpop.f32.mrf.mxu0
    %v673 = vadd.f32 %v483, %v672
    %674 = vmatmul.bf16.gmra.mxu0 %v535
    %v675 = vpop.f32.mrf.mxu0
    %v676 = vadd.f32 %v483, %v675
    %v677 = vpop.f32.mrf.mxu0
    %v678 = vadd.f32 %v483, %v677
    %679 = vmatmul.bf16.gmra.mxu0 %v537
    %v680 = vpop.f32.mrf.mxu0
    %v681 = vadd.f32 %v483, %v680
    %v682 = vpop.f32.mrf.mxu0
    %v683 = vadd.f32 %v483, %v682
    %684 = vmatmul.bf16.gmra.mxu0 %v539
    %v685 = vpop.f32.mrf.mxu0
    %v686 = vadd.f32 %v483, %v685
    %v687 = vpop.f32.mrf.mxu0
    %v688 = vadd.f32 %v483, %v687
    %689 = vmatmul.bf16.gmra.mxu0 %v541
    %v690 = vpop.f32.mrf.mxu0
    %v691 = vadd.f32 %v483, %v690
    %v692 = vpop.f32.mrf.mxu0
    %v693 = vadd.f32 %v483, %v692
    %694 = vmatmul.bf16.gmra.mxu0 %v543
    %v695 = vpop.f32.mrf.mxu0
    %v696 = vadd.f32 %v483, %v695
    %v697 = vpop.f32.mrf.mxu0
    %v698 = vadd.f32 %v483, %v697
    %699 = vmatmul.bf16.gmra.mxu0 %v545
    %v700 = vpop.f32.mrf.mxu0
    %v701 = vadd.f32 %v483, %v700
    %v702 = vpop.f32.mrf.mxu0
    %v703 = vadd.f32 %v483, %v702
    %704 = vmatmul.bf16.gmra.mxu0 %v547
    %v705 = vpop.f32.mrf.mxu0
    %v706 = vadd.f32 %v483, %v705
    %v707 = vpop.f32.mrf.mxu0
    %v708 = vadd.f32 %v483, %v707
    %709 = vdwg.mxu0
    %710 = vmatpush.bf16.msra.mxu0 %v644
    %711 = vmatpush.bf16.msra.mxu0 %v643
    %712 = vmatpush.bf16.msra.mxu0 %v642
    %713 = vmatpush.bf16.msra.mxu0 %v641
    %714 = vmatpush.bf16.msra.mxu0 %v640
    %715 = vmatpush.bf16.msra.mxu0 %v639
    %716 = vmatpush.bf16.msra.mxu0 %v638
    %717 = vmatpush.bf16.msra.mxu0 %v637
    %718 = vmatmul.bf16.gmra.mxu0 %v534
    %v719 = vpop.f32.mrf.mxu0
    %v720 = vadd.f32 %v671, %v719
    %v721 = vpop.f32.mrf.mxu0
    %v722 = vadd.f32 %v673, %v721
    %723 = vmatmul.bf16.gmra.mxu0 %v536
    %v724 = vpop.f32.mrf.mxu0
    %v725 = vadd.f32 %v676, %v724
    %v726 = vpop.f32.mrf.mxu0
    %v727 = vadd.f32 %v678, %v726
    %728 = vmatmul.bf16.gmra.mxu0 %v538
    %v729 = vpop.f32.mrf.mxu0
    %v730 = vadd.f32 %v681, %v729
    %v731 = vpop.f32.mrf.mxu0
    %v732 = vadd.f32 %v683, %v731
    %733 = vmatmul.bf16.gmra.mxu0 %v540
    %v734 = vpop.f32.mrf.mxu0
    %v735 = vadd.f32 %v686, %v734
    %v736 = vpop.f32.mrf.mxu0
    %v737 = vadd.f32 %v688, %v736
    %738 = vmatmul.bf16.gmra.mxu0 %v542
    %v739 = vpop.f32.mrf.mxu0
    %v740 = vadd.f32 %v691, %v739
    %v741 = vpop.f32.mrf.mxu0
    %v742 = vadd.f32 %v693, %v741
    %743 = vmatmul.bf16.gmra.mxu0 %v544
    %v744 = vpop.f32.mrf.mxu0
    %v745 = vadd.f32 %v696, %v744
    %v746 = vpop.f32.mrf.mxu0
    %v747 = vadd.f32 %v698, %v746
    %748 = vmatmul.bf16.gmra.mxu0 %v546
    %v749 = vpop.f32.mrf.mxu0
    %v750 = vadd.f32 %v701, %v749
    %v751 = vpop.f32.mrf.mxu0
    %v752 = vadd.f32 %v703, %v751
    %753 = vmatmul.bf16.gmra.mxu0 %v548
    %v754 = vpop.f32.mrf.mxu0
    %v755 = vadd.f32 %v706, %v754
    %v756 = vpop.f32.mrf.mxu0
    %v757 = vadd.f32 %v708, %v756
    %758 = vdwg.mxu0
    %v759 = vmax.f32 %v720, 0.0
    %v760 = vmax.f32 %v722, 0.0
    %v761 = vmax.f32 %v725, 0.0
    %v762 = vmax.f32 %v727, 0.0
    %v763 = vmax.f32 %v730, 0.0
    %v764 = vmax.f32 %v732, 0.0
    %v765 = vmax.f32 %v735, 0.0
    %v766 = vmax.f32 %v737, 0.0
    %v767 = vmax.f32 %v740, 0.0
    %v768 = vmax.f32 %v742, 0.0
    %v769 = vmax.f32 %v745, 0.0
    %v770 = vmax.f32 %v747, 0.0
    %v771 = vmax.f32 %v750, 0.0
    %v772 = vmax.f32 %v752, 0.0
    %v773 = vmax.f32 %v755, 0.0
    %v774 = vmax.f32 %v757, 0.0
    %v775 = vpack.c.bf16 %v759, %v759
    %v776 = vpack.c.bf16 %v760, %v760
    %v777 = vpack.c.bf16 %v761, %v761
    %v778 = vpack.c.bf16 %v762, %v762
    %v779 = vpack.c.bf16 %v763, %v763
    %v780 = vpack.c.bf16 %v764, %v764
    %v781 = vpack.c.bf16 %v765, %v765
    %v782 = vpack.c.bf16 %v766, %v766
    %v783 = vpack.c.bf16 %v767, %v767
    %v784 = vpack.c.bf16 %v768, %v768
    %v785 = vpack.c.bf16 %v769, %v769
    %v786 = vpack.c.bf16 %v770, %v770
    %v787 = vpack.c.bf16 %v771, %v771
    %v788 = vpack.c.bf16 %v772, %v772
    %v789 = vpack.c.bf16 %v773, %v773
    %v790 = vpack.c.bf16 %v774, %v774
    %v791 = vld [vmem:[#allocation8] sm:$0xf]
    %v792 = vld [vmem:[#allocation8 + $0x4] sm:$0xf]
    %v793 = vld [vmem:[#allocation8 + $0x8] sm:$0xf]
    %v794 = vld [vmem:[#allocation8 + $0xc] sm:$0xf]
    %v795 = vld [vmem:[#allocation8 + $0x10] sm:$0xf]
    %v796 = vld [vmem:[#allocation8 + $0x14] sm:$0xf]
    %v797 = vld [vmem:[#allocation8 + $0x18] sm:$0xf]
    %v798 = vld [vmem:[#allocation8 + $0x1c] sm:$0xf]
    %v799 = vld [vmem:[#allocation8 + $0x20] sm:$0xf]
    %v800 = vld [vmem:[#allocation8 + $0x24] sm:$0xf]
    %v801 = vld [vmem:[#allocation8 + $0x28] sm:$0xf]
    %v802 = vld [vmem:[#allocation8 + $0x2c] sm:$0xf]
    %v803 = vld [vmem:[#allocation8 + $0x30] sm:$0xf]
    %v804 = vld [vmem:[#allocation8 + $0x34] sm:$0xf]
    %v805 = vld [vmem:[#allocation8 + $0x38] sm:$0xf]
    %v806 = vld [vmem:[#allocation8 + $0x3c] sm:$0xf]
    %v807 = vld [vmem:[#allocation8 + $0x40] sm:$0xf]
    %v808 = vld [vmem:[#allocation8 + $0x44] sm:$0xf]
    %v809 = vld [vmem:[#allocation8 + $0x48] sm:$0xf]
    %v810 = vld [vmem:[#allocation8 + $0x4c] sm:$0xf]
    %v811 = vld [vmem:[#allocation8 + $0x50] sm:$0xf]
    %v812 = vld [vmem:[#allocation8 + $0x54] sm:$0xf]
    %v813 = vld [vmem:[#allocation8 + $0x58] sm:$0xf]
    %v814 = vld [vmem:[#allocation8 + $0x5c] sm:$0xf]
    %v815 = vld [vmem:[#allocation8 + $0x60] sm:$0xf]
    %v816 = vld [vmem:[#allocation8 + $0x64] sm:$0xf]
    %v817 = vld [vmem:[#allocation8 + $0x68] sm:$0xf]
    %v818 = vld [vmem:[#allocation8 + $0x6c] sm:$0xf]
    %v819 = vld [vmem:[#allocation8 + $0x70] sm:$0xf]
    %v820 = vld [vmem:[#allocation8 + $0x74] sm:$0xf]
    %v821 = vld [vmem:[#allocation8 + $0x78] sm:$0xf]
    %v822 = vld [vmem:[#allocation8 + $0x7c] sm:$0xf]
    %v823 = vld [vmem:[%s6] sm:$0x1]
    %v824 = vld [vmem:[#allocation3] sm:$0xf]
    %v825 = vld [vmem:[#allocation3 + $0x4] sm:$0xf]
    %v826 = vld [vmem:[#allocation3 + $0x8] sm:$0xf]
    %v827 = vld [vmem:[#allocation3 + $0xc] sm:$0xf]
    %v828 = vld [vmem:[#allocation3 + $0x10] sm:$0xf]
    %v829 = vld [vmem:[#allocation3 + $0x14] sm:$0xf]
    %v830 = vld [vmem:[#allocation3 + $0x18] sm:$0xf]
    %v831 = vld [vmem:[#allocation3 + $0x1c] sm:$0xf]
    %v832 = vld [vmem:[#allocation3 + $0x20] sm:$0xf]
    %v833 = vld [vmem:[#allocation3 + $0x24] sm:$0xf]
    %v834 = vld [vmem:[#allocation3 + $0x28] sm:$0xf]
    %v835 = vld [vmem:[#allocation3 + $0x2c] sm:$0xf]
    %v836 = vld [vmem:[#allocation3 + $0x30] sm:$0xf]
    %v837 = vld [vmem:[#allocation3 + $0x34] sm:$0xf]
    %v838 = vld [vmem:[#allocation3 + $0x38] sm:$0xf]
    %v839 = vld [vmem:[#allocation3 + $0x3c] sm:$0xf]
    %v856 = vunpack.c.l.b16 %v824
    %v857 = vunpack.c.l.b16 %v825
    %v858 = vunpack.c.l.b16 %v826
    %v859 = vunpack.c.l.b16 %v827
    %v860 = vunpack.c.l.b16 %v828
    %v861 = vunpack.c.l.b16 %v829
    %v862 = vunpack.c.l.b16 %v830
    %v863 = vunpack.c.l.b16 %v831
    %v864 = vunpack.c.l.b16 %v832
    %v865 = vunpack.c.l.b16 %v833
    %v866 = vunpack.c.l.b16 %v834
    %v867 = vunpack.c.l.b16 %v835
    %v868 = vunpack.c.l.b16 %v836
    %v869 = vunpack.c.l.b16 %v837
    %v870 = vunpack.c.l.b16 %v838
    %v871 = vunpack.c.l.b16 %v839
    %v872 = vpack.c.b16 %v857, %v856
    %v873 = vpack.c.b16 %v859, %v858
    %v874 = vpack.c.b16 %v861, %v860
    %v875 = vpack.c.b16 %v863, %v862
    %v876 = vpack.c.b16 %v865, %v864
    %v877 = vpack.c.b16 %v867, %v866
    %v878 = vpack.c.b16 %v869, %v868
    %v879 = vpack.c.b16 %v871, %v870
    %v904 = vunpack.c.l.b16 %v775
    %v905 = vunpack.c.l.b16 %v776
    %v906 = vunpack.c.l.b16 %v777
    %v907 = vunpack.c.l.b16 %v778
    %v908 = vunpack.c.l.b16 %v779
    %v909 = vunpack.c.l.b16 %v780
    %v910 = vunpack.c.l.b16 %v781
    %v911 = vunpack.c.l.b16 %v782
    %v912 = vunpack.c.l.b16 %v783
    %v913 = vunpack.c.l.b16 %v784
    %v914 = vunpack.c.l.b16 %v785
    %v915 = vunpack.c.l.b16 %v786
    %v916 = vunpack.c.l.b16 %v787
    %v917 = vunpack.c.l.b16 %v788
    %v918 = vunpack.c.l.b16 %v789
    %v919 = vunpack.c.l.b16 %v790
    %v920 = vpack.c.b16 %v905, %v904
    %v921 = vpack.c.b16 %v907, %v906
    %v922 = vpack.c.b16 %v909, %v908
    %v923 = vpack.c.b16 %v911, %v910
    %v924 = vpack.c.b16 %v913, %v912
    %v925 = vpack.c.b16 %v915, %v914
    %v926 = vpack.c.b16 %v917, %v916
    %v927 = vpack.c.b16 %v919, %v918
    %936 = vmatpush.bf16.msra.mxu0 %v927
    %937 = vmatpush.bf16.msra.mxu0 %v926
    %938 = vmatpush.bf16.msra.mxu0 %v925
    %939 = vmatpush.bf16.msra.mxu0 %v924
    %940 = vmatpush.bf16.msra.mxu0 %v923
    %941 = vmatpush.bf16.msra.mxu0 %v922
    %942 = vmatpush.bf16.msra.mxu0 %v921
    %943 = vmatpush.bf16.msra.mxu0 %v920
    %944 = vmatmul.bf16.gmra.mxu0 %v872
    %v945 = vpop.f32.mrf.mxu0
    %v946 = vadd.f32 0.0, %v945
    %v947 = vpop.f32.mrf.mxu0
    %v948 = vadd.f32 0.0, %v947
    %949 = vmatmul.bf16.gmra.mxu0 %v873
    %v950 = vpop.f32.mrf.mxu0
    %v951 = vadd.f32 0.0, %v950
    %v952 = vpop.f32.mrf.mxu0
    %v953 = vadd.f32 0.0, %v952
    %954 = vmatmul.bf16.gmra.mxu0 %v874
    %v955 = vpop.f32.mrf.mxu0
    %v956 = vadd.f32 0.0, %v955
    %v957 = vpop.f32.mrf.mxu0
    %v958 = vadd.f32 0.0, %v957
    %959 = vmatmul.bf16.gmra.mxu0 %v875
    %v960 = vpop.f32.mrf.mxu0
    %v961 = vadd.f32 0.0, %v960
    %v962 = vpop.f32.mrf.mxu0
    %v963 = vadd.f32 0.0, %v962
    %964 = vmatmul.bf16.gmra.mxu0 %v876
    %v965 = vpop.f32.mrf.mxu0
    %v966 = vadd.f32 0.0, %v965
    %v967 = vpop.f32.mrf.mxu0
    %v968 = vadd.f32 0.0, %v967
    %969 = vmatmul.bf16.gmra.mxu0 %v877
    %v970 = vpop.f32.mrf.mxu0
    %v971 = vadd.f32 0.0, %v970
    %v972 = vpop.f32.mrf.mxu0
    %v973 = vadd.f32 0.0, %v972
    %974 = vmatmul.bf16.gmra.mxu0 %v878
    %v975 = vpop.f32.mrf.mxu0
    %v976 = vadd.f32 0.0, %v975
    %v977 = vpop.f32.mrf.mxu0
    %v978 = vadd.f32 0.0, %v977
    %979 = vmatmul.bf16.gmra.mxu0 %v879
    %v980 = vpop.f32.mrf.mxu0
    %v981 = vadd.f32 0.0, %v980
    %v982 = vpop.f32.mrf.mxu0
    %v983 = vadd.f32 0.0, %v982
    %984 = vdwg.mxu0
    %v985 = vld [vmem:[%s1] sm:$0xff]
    %v986 = vld [vmem:[%s1 + $0x8] sm:$0xff]
    %v987 = vld [vmem:[%s1 + $0x10] sm:$0xff]
    %v988 = vld [vmem:[%s1 + $0x18] sm:$0xff]
    %v989 = vld [vmem:[%s1 + $0x20] sm:$0xff]
    %v990 = vld [vmem:[%s1 + $0x28] sm:$0xff]
    %v991 = vld [vmem:[%s1 + $0x30] sm:$0xff]
    %v992 = vld [vmem:[%s1 + $0x38] sm:$0xff]
    %v993 = vld [vmem:[%s1 + $0x40] sm:$0xff]
    %v994 = vld [vmem:[%s1 + $0x48] sm:$0xff]
    %v995 = vld [vmem:[%s1 + $0x50] sm:$0xff]
    %v996 = vld [vmem:[%s1 + $0x58] sm:$0xff]
    %v997 = vld [vmem:[%s1 + $0x60] sm:$0xff]
    %v998 = vld [vmem:[%s1 + $0x68] sm:$0xff]
    %v999 = vld [vmem:[%s1 + $0x70] sm:$0xff]
    %v1000 = vld [vmem:[%s1 + $0x78] sm:$0xff]
    %1002 = vset.pattern.permute.xlu0 0
    %1003 = vperm.xlu0 %1002, %v985
    %v1004 = vpop.permute.xlu0 %1003
    %1007 = vset.pattern.permute.xlu0 0
    %1008 = vperm.xlu0 %1007, %v986
    %v1009 = vpop.permute.xlu0 %1008
    %1012 = vset.pattern.permute.xlu0 0
    %1013 = vperm.xlu0 %1012, %v987
    %v1014 = vpop.permute.xlu0 %1013
    %1017 = vset.pattern.permute.xlu0 0
    %1018 = vperm.xlu0 %1017, %v988
    %v1019 = vpop.permute.xlu0 %1018
    %1022 = vset.pattern.permute.xlu0 0
    %1023 = vperm.xlu0 %1022, %v989
    %v1024 = vpop.permute.xlu0 %1023
    %1027 = vset.pattern.permute.xlu0 0
    %1028 = vperm.xlu0 %1027, %v990
    %v1029 = vpop.permute.xlu0 %1028
    %1032 = vset.pattern.permute.xlu0 0
    %1033 = vperm.xlu0 %1032, %v991
    %v1034 = vpop.permute.xlu0 %1033
    %1037 = vset.pattern.permute.xlu0 0
    %1038 = vperm.xlu0 %1037, %v992
    %v1039 = vpop.permute.xlu0 %1038
    %1042 = vset.pattern.permute.xlu0 0
    %1043 = vperm.xlu0 %1042, %v993
    %v1044 = vpop.permute.xlu0 %1043
    %1047 = vset.pattern.permute.xlu0 0
    %1048 = vperm.xlu0 %1047, %v994
    %v1049 = vpop.permute.xlu0 %1048
    %1052 = vset.pattern.permute.xlu0 0
    %1053 = vperm.xlu0 %1052, %v995
    %v1054 = vpop.permute.xlu0 %1053
    %1057 = vset.pattern.permute.xlu0 0
    %1058 = vperm.xlu0 %1057, %v996
    %v1059 = vpop.permute.xlu0 %1058
    %1062 = vset.pattern.permute.xlu0 0
    %1063 = vperm.xlu0 %1062, %v997
    %v1064 = vpop.permute.xlu0 %1063
    %1067 = vset.pattern.permute.xlu0 0
    %1068 = vperm.xlu0 %1067, %v998
    %v1069 = vpop.permute.xlu0 %1068
    %1072 = vset.pattern.permute.xlu0 0
    %1073 = vperm.xlu0 %1072, %v999
    %v1074 = vpop.permute.xlu0 %1073
    %1077 = vset.pattern.permute.xlu0 0
    %1078 = vperm.xlu0 %1077, %v1000
    %v1079 = vpop.permute.xlu0 %1078
    %v1081 = vmul.f32 %v1004, %v946
    %v1082 = vmul.f32 %v1009, %v948
    %v1083 = vmul.f32 %v1014, %v951
    %v1084 = vmul.f32 %v1019, %v953
    %v1085 = vmul.f32 %v1024, %v956
    %v1086 = vmul.f32 %v1029, %v958
    %v1087 = vmul.f32 %v1034, %v961
    %v1088 = vmul.f32 %v1039, %v963
    %v1089 = vmul.f32 %v1044, %v966
    %v1090 = vmul.f32 %v1049, %v968
    %v1091 = vmul.f32 %v1054, %v971
    %v1092 = vmul.f32 %v1059, %v973
    %v1093 = vmul.f32 %v1064, %v976
    %v1094 = vmul.f32 %v1069, %v978
    %v1095 = vmul.f32 %v1074, %v981
    %v1096 = vmul.f32 %v1079, %v983
    %v1097 = vpack.c.bf16 %v1081, %v1081
    %v1098 = vpack.c.bf16 %v1082, %v1082
    %v1099 = vpack.c.bf16 %v1083, %v1083
    %v1100 = vpack.c.bf16 %v1084, %v1084
    %v1101 = vpack.c.bf16 %v1085, %v1085
    %v1102 = vpack.c.bf16 %v1086, %v1086
    %v1103 = vpack.c.bf16 %v1087, %v1087
    %v1104 = vpack.c.bf16 %v1088, %v1088
    %v1105 = vpack.c.bf16 %v1089, %v1089
    %v1106 = vpack.c.bf16 %v1090, %v1090
    %v1107 = vpack.c.bf16 %v1091, %v1091
    %v1108 = vpack.c.bf16 %v1092, %v1092
    %v1109 = vpack.c.bf16 %v1093, %v1093
    %v1110 = vpack.c.bf16 %v1094, %v1094
    %v1111 = vpack.c.bf16 %v1095, %v1095
    %v1112 = vpack.c.bf16 %v1096, %v1096
    %1113 = vst [vmem:[#allocation2] sm:$0xf] %v775
    %1114 = vst [vmem:[#allocation2 + $0x8] sm:$0xf] %v776
    %1115 = vst [vmem:[#allocation2 + $0x10] sm:$0xf] %v777
    %1116 = vst [vmem:[#allocation2 + $0x18] sm:$0xf] %v778
    %1117 = vst [vmem:[#allocation2 + $0x20] sm:$0xf] %v779
    %1118 = vst [vmem:[#allocation2 + $0x28] sm:$0xf] %v780
    %1119 = vst [vmem:[#allocation2 + $0x30] sm:$0xf] %v781
    %1120 = vst [vmem:[#allocation2 + $0x38] sm:$0xf] %v782
    %1121 = vst [vmem:[#allocation2 + $0x40] sm:$0xf] %v783
    %1122 = vst [vmem:[#allocation2 + $0x48] sm:$0xf] %v784
    %1123 = vst [vmem:[#allocation2 + $0x50] sm:$0xf] %v785
    %1124 = vst [vmem:[#allocation2 + $0x58] sm:$0xf] %v786
    %1125 = vst [vmem:[#allocation2 + $0x60] sm:$0xf] %v787
    %1126 = vst [vmem:[#allocation2 + $0x68] sm:$0xf] %v788
    %1127 = vst [vmem:[#allocation2 + $0x70] sm:$0xf] %v789
    %1128 = vst [vmem:[#allocation2 + $0x78] sm:$0xf] %v790
    %1129 = vst [vmem:[#allocation2 + $0x4] sm:$0xf] %v1097
    %1130 = vst [vmem:[#allocation2 + $0xc] sm:$0xf] %v1098
    %1131 = vst [vmem:[#allocation2 + $0x14] sm:$0xf] %v1099
    %1132 = vst [vmem:[#allocation2 + $0x1c] sm:$0xf] %v1100
    %1133 = vst [vmem:[#allocation2 + $0x24] sm:$0xf] %v1101
    %1134 = vst [vmem:[#allocation2 + $0x2c] sm:$0xf] %v1102
    %1135 = vst [vmem:[#allocation2 + $0x34] sm:$0xf] %v1103
    %1136 = vst [vmem:[#allocation2 + $0x3c] sm:$0xf] %v1104
    %1137 = vst [vmem:[#allocation2 + $0x44] sm:$0xf] %v1105
    %1138 = vst [vmem:[#allocation2 + $0x4c] sm:$0xf] %v1106
    %1139 = vst [vmem:[#allocation2 + $0x54] sm:$0xf] %v1107
    %1140 = vst [vmem:[#allocation2 + $0x5c] sm:$0xf] %v1108
    %1141 = vst [vmem:[#allocation2 + $0x64] sm:$0xf] %v1109
    %1142 = vst [vmem:[#allocation2 + $0x6c] sm:$0xf] %v1110
    %1143 = vst [vmem:[#allocation2 + $0x74] sm:$0xf] %v1111
    %1144 = vst [vmem:[#allocation2 + $0x7c] sm:$0xf] %v1112
    %v1145 = vld [vmem:[#allocation2] sm:$0xff]
    %v1146 = vld [vmem:[#allocation2 + $0x8] sm:$0xff]
    %v1147 = vld [vmem:[#allocation2 + $0x10] sm:$0xff]
    %v1148 = vld [vmem:[#allocation2 + $0x18] sm:$0xff]
    %v1149 = vld [vmem:[#allocation2 + $0x20] sm:$0xff]
    %v1150 = vld [vmem:[#allocation2 + $0x28] sm:$0xff]
    %v1151 = vld [vmem:[#allocation2 + $0x30] sm:$0xff]
    %v1152 = vld [vmem:[#allocation2 + $0x38] sm:$0xff]
    %v1153 = vld [vmem:[#allocation2 + $0x40] sm:$0xff]
    %v1154 = vld [vmem:[#allocation2 + $0x48] sm:$0xff]
    %v1155 = vld [vmem:[#allocation2 + $0x50] sm:$0xff]
    %v1156 = vld [vmem:[#allocation2 + $0x58] sm:$0xff]
    %v1157 = vld [vmem:[#allocation2 + $0x60] sm:$0xff]
    %v1158 = vld [vmem:[#allocation2 + $0x68] sm:$0xff]
    %v1159 = vld [vmem:[#allocation2 + $0x70] sm:$0xff]
    %v1160 = vld [vmem:[#allocation2 + $0x78] sm:$0xff]
    %v1162 = vperm.slane %v823, 0
    %v1180 = vunpack.c.l.b16 %v1145
    %v1181 = vunpack.c.h.b16 %v1145
    %v1182 = vunpack.c.l.b16 %v1146
    %v1183 = vunpack.c.h.b16 %v1146
    %v1184 = vunpack.c.l.b16 %v1147
    %v1185 = vunpack.c.h.b16 %v1147
    %v1186 = vunpack.c.l.b16 %v1148
    %v1187 = vunpack.c.h.b16 %v1148
    %v1188 = vunpack.c.l.b16 %v1149
    %v1189 = vunpack.c.h.b16 %v1149
    %v1190 = vunpack.c.l.b16 %v1150
    %v1191 = vunpack.c.h.b16 %v1150
    %v1192 = vunpack.c.l.b16 %v1151
    %v1193 = vunpack.c.h.b16 %v1151
    %v1194 = vunpack.c.l.b16 %v1152
    %v1195 = vunpack.c.h.b16 %v1152
    %v1196 = vunpack.c.l.b16 %v1153
    %v1197 = vunpack.c.h.b16 %v1153
    %v1198 = vunpack.c.l.b16 %v1154
    %v1199 = vunpack.c.h.b16 %v1154
    %v1200 = vunpack.c.l.b16 %v1155
    %v1201 = vunpack.c.h.b16 %v1155
    %v1202 = vunpack.c.l.b16 %v1156
    %v1203 = vunpack.c.h.b16 %v1156
    %v1204 = vunpack.c.l.b16 %v1157
    %v1205 = vunpack.c.h.b16 %v1157
    %v1206 = vunpack.c.l.b16 %v1158
    %v1207 = vunpack.c.h.b16 %v1158
    %v1208 = vunpack.c.l.b16 %v1159
    %v1209 = vunpack.c.h.b16 %v1159
    %v1210 = vunpack.c.l.b16 %v1160
    %v1211 = vunpack.c.h.b16 %v1160
    %v1212 = vpack.c.b16 %v1182, %v1180
    %v1213 = vpack.c.b16 %v1183, %v1181
    %v1214 = vpack.c.b16 %v1186, %v1184
    %v1215 = vpack.c.b16 %v1187, %v1185
    %v1216 = vpack.c.b16 %v1190, %v1188
    %v1217 = vpack.c.b16 %v1191, %v1189
    %v1218 = vpack.c.b16 %v1194, %v1192
    %v1219 = vpack.c.b16 %v1195, %v1193
    %v1220 = vpack.c.b16 %v1198, %v1196
    %v1221 = vpack.c.b16 %v1199, %v1197
    %v1222 = vpack.c.b16 %v1202, %v1200
    %v1223 = vpack.c.b16 %v1203, %v1201
    %v1224 = vpack.c.b16 %v1206, %v1204
    %v1225 = vpack.c.b16 %v1207, %v1205
    %v1226 = vpack.c.b16 %v1210, %v1208
    %v1227 = vpack.c.b16 %v1211, %v1209
    %v1276 = vunpack.c.l.b16 %v791
    %v1277 = vunpack.c.l.b16 %v792
    %v1278 = vunpack.c.l.b16 %v793
    %v1279 = vunpack.c.l.b16 %v794
    %v1280 = vunpack.c.l.b16 %v795
    %v1281 = vunpack.c.l.b16 %v796
    %v1282 = vunpack.c.l.b16 %v797
    %v1283 = vunpack.c.l.b16 %v798
    %v1284 = vunpack.c.l.b16 %v799
    %v1285 = vunpack.c.l.b16 %v800
    %v1286 = vunpack.c.l.b16 %v801
    %v1287 = vunpack.c.l.b16 %v802
    %v1288 = vunpack.c.l.b16 %v803
    %v1289 = vunpack.c.l.b16 %v804
    %v1290 = vunpack.c.l.b16 %v805
    %v1291 = vunpack.c.l.b16 %v806
    %v1292 = vunpack.c.l.b16 %v807
    %v1293 = vunpack.c.l.b16 %v808
    %v1294 = vunpack.c.l.b16 %v809
    %v1295 = vunpack.c.l.b16 %v810
    %v1296 = vunpack.c.l.b16 %v811
    %v1297 = vunpack.c.l.b16 %v812
    %v1298 = vunpack.c.l.b16 %v813
    %v1299 = vunpack.c.l.b16 %v814
    %v1300 = vunpack.c.l.b16 %v815
    %v1301 = vunpack.c.l.b16 %v816
    %v1302 = vunpack.c.l.b16 %v817
    %v1303 = vunpack.c.l.b16 %v818
    %v1304 = vunpack.c.l.b16 %v819
    %v1305 = vunpack.c.l.b16 %v820
    %v1306 = vunpack.c.l.b16 %v821
    %v1307 = vunpack.c.l.b16 %v822
    %v1308 = vpack.c.b16 %v1277, %v1276
    %v1309 = vpack.c.b16 %v1279, %v1278
    %v1310 = vpack.c.b16 %v1281, %v1280
    %v1311 = vpack.c.b16 %v1283, %v1282
    %v1312 = vpack.c.b16 %v1285, %v1284
    %v1313 = vpack.c.b16 %v1287, %v1286
    %v1314 = vpack.c.b16 %v1289, %v1288
    %v1315 = vpack.c.b16 %v1291, %v1290
    %v1316 = vpack.c.b16 %v1293, %v1292
    %v1317 = vpack.c.b16 %v1295, %v1294
    %v1318 = vpack.c.b16 %v1297, %v1296
    %v1319 = vpack.c.b16 %v1299, %v1298
    %v1320 = vpack.c.b16 %v1301, %v1300
    %v1321 = vpack.c.b16 %v1303, %v1302
    %v1322 = vpack.c.b16 %v1305, %v1304
    %v1323 = vpack.c.b16 %v1307, %v1306
    %1340 = vmatpush.bf16.msra.mxu0 %v1315
    %1341 = vmatpush.bf16.msra.mxu0 %v1314
    %1342 = vmatpush.bf16.msra.mxu0 %v1313
    %1343 = vmatpush.bf16.msra.mxu0 %v1312
    %1344 = vmatpush.bf16.msra.mxu0 %v1311
    %1345 = vmatpush.bf16.msra.mxu0 %v1310
    %1346 = vmatpush.bf16.msra.mxu0 %v1309
    %1347 = vmatpush.bf16.msra.mxu0 %v1308
    %1348 = vmatmul.bf16.gmra.mxu0 %v1212
    %v1349 = vpop.f32.mrf.mxu0
    %v1350 = vadd.f32 %v1162, %v1349
    %v1351 = vpop.f32.mrf.mxu0
    %v1352 = vadd.f32 %v1162, %v1351
    %1353 = vmatmul.bf16.gmra.mxu0 %v1214
    %v1354 = vpop.f32.mrf.mxu0
    %v1355 = vadd.f32 %v1162, %v1354
    %v1356 = vpop.f32.mrf.mxu0
    %v1357 = vadd.f32 %v1162, %v1356
    %1358 = vmatmul.bf16.gmra.mxu0 %v1216
    %v1359 = vpop.f32.mrf.mxu0
    %v1360 = vadd.f32 %v1162, %v1359
    %v1361 = vpop.f32.mrf.mxu0
    %v1362 = vadd.f32 %v1162, %v1361
    %1363 = vmatmul.bf16.gmra.mxu0 %v1218
    %v1364 = vpop.f32.mrf.mxu0
    %v1365 = vadd.f32 %v1162, %v1364
    %v1366 = vpop.f32.mrf.mxu0
    %v1367 = vadd.f32 %v1162, %v1366
    %1368 = vmatmul.bf16.gmra.mxu0 %v1220
    %v1369 = vpop.f32.mrf.mxu0
    %v1370 = vadd.f32 %v1162, %v1369
    %v1371 = vpop.f32.mrf.mxu0
    %v1372 = vadd.f32 %v1162, %v1371
    %1373 = vmatmul.bf16.gmra.mxu0 %v1222
    %v1374 = vpop.f32.mrf.mxu0
    %v1375 = vadd.f32 %v1162, %v1374
    %v1376 = vpop.f32.mrf.mxu0
    %v1377 = vadd.f32 %v1162, %v1376
    %1378 = vmatmul.bf16.gmra.mxu0 %v1224
    %v1379 = vpop.f32.mrf.mxu0
    %v1380 = vadd.f32 %v1162, %v1379
    %v1381 = vpop.f32.mrf.mxu0
    %v1382 = vadd.f32 %v1162, %v1381
    %1383 = vmatmul.bf16.gmra.mxu0 %v1226
    %v1384 = vpop.f32.mrf.mxu0
    %v1385 = vadd.f32 %v1162, %v1384
    %v1386 = vpop.f32.mrf.mxu0
    %v1387 = vadd.f32 %v1162, %v1386
    %1388 = vdwg.mxu0
    %1389 = vmatpush.bf16.msra.mxu0 %v1323
    %1390 = vmatpush.bf16.msra.mxu0 %v1322
    %1391 = vmatpush.bf16.msra.mxu0 %v1321
    %1392 = vmatpush.bf16.msra.mxu0 %v1320
    %1393 = vmatpush.bf16.msra.mxu0 %v1319
    %1394 = vmatpush.bf16.msra.mxu0 %v1318
    %1395 = vmatpush.bf16.msra.mxu0 %v1317
    %1396 = vmatpush.bf16.msra.mxu0 %v1316
    %1397 = vmatmul.bf16.gmra.mxu0 %v1213
    %v1398 = vpop.f32.mrf.mxu0
    %v1399 = vadd.f32 %v1350, %v1398
    %v1400 = vpop.f32.mrf.mxu0
    %v1401 = vadd.f32 %v1352, %v1400
    %1402 = vmatmul.bf16.gmra.mxu0 %v1215
    %v1403 = vpop.f32.mrf.mxu0
    %v1404 = vadd.f32 %v1355, %v1403
    %v1405 = vpop.f32.mrf.mxu0
    %v1406 = vadd.f32 %v1357, %v1405
    %1407 = vmatmul.bf16.gmra.mxu0 %v1217
    %v1408 = vpop.f32.mrf.mxu0
    %v1409 = vadd.f32 %v1360, %v1408
    %v1410 = vpop.f32.mrf.mxu0
    %v1411 = vadd.f32 %v1362, %v1410
    %1412 = vmatmul.bf16.gmra.mxu0 %v1219
    %v1413 = vpop.f32.mrf.mxu0
    %v1414 = vadd.f32 %v1365, %v1413
    %v1415 = vpop.f32.mrf.mxu0
    %v1416 = vadd.f32 %v1367, %v1415
    %1417 = vmatmul.bf16.gmra.mxu0 %v1221
    %v1418 = vpop.f32.mrf.mxu0
    %v1419 = vadd.f32 %v1370, %v1418
    %v1420 = vpop.f32.mrf.mxu0
    %v1421 = vadd.f32 %v1372, %v1420
    %1422 = vmatmul.bf16.gmra.mxu0 %v1223
    %v1423 = vpop.f32.mrf.mxu0
    %v1424 = vadd.f32 %v1375, %v1423
    %v1425 = vpop.f32.mrf.mxu0
    %v1426 = vadd.f32 %v1377, %v1425
    %1427 = vmatmul.bf16.gmra.mxu0 %v1225
    %v1428 = vpop.f32.mrf.mxu0
    %v1429 = vadd.f32 %v1380, %v1428
    %v1430 = vpop.f32.mrf.mxu0
    %v1431 = vadd.f32 %v1382, %v1430
    %1432 = vmatmul.bf16.gmra.mxu0 %v1227
    %v1433 = vpop.f32.mrf.mxu0
    %v1434 = vadd.f32 %v1385, %v1433
    %v1435 = vpop.f32.mrf.mxu0
    %v1436 = vadd.f32 %v1387, %v1435
    %1437 = vdwg.mxu0
    %v1438 = vmax.f32 %v1399, 0.0
    %v1439 = vmax.f32 %v1401, 0.0
    %v1440 = vmax.f32 %v1404, 0.0
    %v1441 = vmax.f32 %v1406, 0.0
    %v1442 = vmax.f32 %v1409, 0.0
    %v1443 = vmax.f32 %v1411, 0.0
    %v1444 = vmax.f32 %v1414, 0.0
    %v1445 = vmax.f32 %v1416, 0.0
    %v1446 = vmax.f32 %v1419, 0.0
    %v1447 = vmax.f32 %v1421, 0.0
    %v1448 = vmax.f32 %v1424, 0.0
    %v1449 = vmax.f32 %v1426, 0.0
    %v1450 = vmax.f32 %v1429, 0.0
    %v1451 = vmax.f32 %v1431, 0.0
    %v1452 = vmax.f32 %v1434, 0.0
    %v1453 = vmax.f32 %v1436, 0.0
    %v1454 = vpack.c.bf16 %v1438, %v1438
    %v1455 = vpack.c.bf16 %v1439, %v1439
    %v1456 = vpack.c.bf16 %v1440, %v1440
    %v1457 = vpack.c.bf16 %v1441, %v1441
    %v1458 = vpack.c.bf16 %v1442, %v1442
    %v1459 = vpack.c.bf16 %v1443, %v1443
    %v1460 = vpack.c.bf16 %v1444, %v1444
    %v1461 = vpack.c.bf16 %v1445, %v1445
    %v1462 = vpack.c.bf16 %v1446, %v1446
    %v1463 = vpack.c.bf16 %v1447, %v1447
    %v1464 = vpack.c.bf16 %v1448, %v1448
    %v1465 = vpack.c.bf16 %v1449, %v1449
    %v1466 = vpack.c.bf16 %v1450, %v1450
    %v1467 = vpack.c.bf16 %v1451, %v1451
    %v1468 = vpack.c.bf16 %v1452, %v1452
    %v1469 = vpack.c.bf16 %v1453, %v1453
    %v1470 = vld [vmem:[#allocation9] sm:$0xf]
    %v1471 = vld [vmem:[#allocation9 + $0x4] sm:$0xf]
    %v1472 = vld [vmem:[#allocation9 + $0x8] sm:$0xf]
    %v1473 = vld [vmem:[#allocation9 + $0xc] sm:$0xf]
    %v1474 = vld [vmem:[#allocation9 + $0x10] sm:$0xf]
    %v1475 = vld [vmem:[#allocation9 + $0x14] sm:$0xf]
    %v1476 = vld [vmem:[#allocation9 + $0x18] sm:$0xf]
    %v1477 = vld [vmem:[#allocation9 + $0x1c] sm:$0xf]
    %v1478 = vld [vmem:[#allocation9 + $0x20] sm:$0xf]
    %v1479 = vld [vmem:[#allocation9 + $0x24] sm:$0xf]
    %v1480 = vld [vmem:[#allocation9 + $0x28] sm:$0xf]
    %v1481 = vld [vmem:[#allocation9 + $0x2c] sm:$0xf]
    %v1482 = vld [vmem:[#allocation9 + $0x30] sm:$0xf]
    %v1483 = vld [vmem:[#allocation9 + $0x34] sm:$0xf]
    %v1484 = vld [vmem:[#allocation9 + $0x38] sm:$0xf]
    %v1485 = vld [vmem:[#allocation9 + $0x3c] sm:$0xf]
    %v1486 = vld [vmem:[#allocation9 + $0x40] sm:$0xf]
    %v1487 = vld [vmem:[#allocation9 + $0x44] sm:$0xf]
    %v1488 = vld [vmem:[#allocation9 + $0x48] sm:$0xf]
    %v1489 = vld [vmem:[#allocation9 + $0x4c] sm:$0xf]
    %v1490 = vld [vmem:[#allocation9 + $0x50] sm:$0xf]
    %v1491 = vld [vmem:[#allocation9 + $0x54] sm:$0xf]
    %v1492 = vld [vmem:[#allocation9 + $0x58] sm:$0xf]
    %v1493 = vld [vmem:[#allocation9 + $0x5c] sm:$0xf]
    %v1494 = vld [vmem:[#allocation9 + $0x60] sm:$0xf]
    %v1495 = vld [vmem:[#allocation9 + $0x64] sm:$0xf]
    %v1496 = vld [vmem:[#allocation9 + $0x68] sm:$0xf]
    %v1497 = vld [vmem:[#allocation9 + $0x6c] sm:$0xf]
    %v1498 = vld [vmem:[#allocation9 + $0x70] sm:$0xf]
    %v1499 = vld [vmem:[#allocation9 + $0x74] sm:$0xf]
    %v1500 = vld [vmem:[#allocation9 + $0x78] sm:$0xf]
    %v1501 = vld [vmem:[#allocation9 + $0x7c] sm:$0xf]
    %v1502 = vld [vmem:[%s8] sm:$0x1]
    %v1503 = vld [vmem:[#allocation3] sm:$0xf]
    %v1504 = vld [vmem:[#allocation3 + $0x4] sm:$0xf]
    %v1505 = vld [vmem:[#allocation3 + $0x8] sm:$0xf]
    %v1506 = vld [vmem:[#allocation3 + $0xc] sm:$0xf]
    %v1507 = vld [vmem:[#allocation3 + $0x10] sm:$0xf]
    %v1508 = vld [vmem:[#allocation3 + $0x14] sm:$0xf]
    %v1509 = vld [vmem:[#allocation3 + $0x18] sm:$0xf]
    %v1510 = vld [vmem:[#allocation3 + $0x1c] sm:$0xf]
    %v1511 = vld [vmem:[#allocation3 + $0x20] sm:$0xf]
    %v1512 = vld [vmem:[#allocation3 + $0x24] sm:$0xf]
    %v1513 = vld [vmem:[#allocation3 + $0x28] sm:$0xf]
    %v1514 = vld [vmem:[#allocation3 + $0x2c] sm:$0xf]
    %v1515 = vld [vmem:[#allocation3 + $0x30] sm:$0xf]
    %v1516 = vld [vmem:[#allocation3 + $0x34] sm:$0xf]
    %v1517 = vld [vmem:[#allocation3 + $0x38] sm:$0xf]
    %v1518 = vld [vmem:[#allocation3 + $0x3c] sm:$0xf]
    %v1535 = vunpack.c.l.b16 %v1503
    %v1536 = vunpack.c.l.b16 %v1504
    %v1537 = vunpack.c.l.b16 %v1505
    %v1538 = vunpack.c.l.b16 %v1506
    %v1539 = vunpack.c.l.b16 %v1507
    %v1540 = vunpack.c.l.b16 %v1508
    %v1541 = vunpack.c.l.b16 %v1509
    %v1542 = vunpack.c.l.b16 %v1510
    %v1543 = vunpack.c.l.b16 %v1511
    %v1544 = vunpack.c.l.b16 %v1512
    %v1545 = vunpack.c.l.b16 %v1513
    %v1546 = vunpack.c.l.b16 %v1514
    %v1547 = vunpack.c.l.b16 %v1515
    %v1548 = vunpack.c.l.b16 %v1516
    %v1549 = vunpack.c.l.b16 %v1517
    %v1550 = vunpack.c.l.b16 %v1518
    %v1551 = vpack.c.b16 %v1536, %v1535
    %v1552 = vpack.c.b16 %v1538, %v1537
    %v1553 = vpack.c.b16 %v1540, %v1539
    %v1554 = vpack.c.b16 %v1542, %v1541
    %v1555 = vpack.c.b16 %v1544, %v1543
    %v1556 = vpack.c.b16 %v1546, %v1545
    %v1557 = vpack.c.b16 %v1548, %v1547
    %v1558 = vpack.c.b16 %v1550, %v1549
    %v1583 = vunpack.c.l.b16 %v1454
    %v1584 = vunpack.c.l.b16 %v1455
    %v1585 = vunpack.c.l.b16 %v1456
    %v1586 = vunpack.c.l.b16 %v1457
    %v1587 = vunpack.c.l.b16 %v1458
    %v1588 = vunpack.c.l.b16 %v1459
    %v1589 = vunpack.c.l.b16 %v1460
    %v1590 = vunpack.c.l.b16 %v1461
    %v1591 = vunpack.c.l.b16 %v1462
    %v1592 = vunpack.c.l.b16 %v1463
    %v1593 = vunpack.c.l.b16 %v1464
    %v1594 = vunpack.c.l.b16 %v1465
    %v1595 = vunpack.c.l.b16 %v1466
    %v1596 = vunpack.c.l.b16 %v1467
    %v1597 = vunpack.c.l.b16 %v1468
    %v1598 = vunpack.c.l.b16 %v1469
    %v1599 = vpack.c.b16 %v1584, %v1583
    %v1600 = vpack.c.b16 %v1586, %v1585
    %v1601 = vpack.c.b16 %v1588, %v1587
    %v1602 = vpack.c.b16 %v1590, %v1589
    %v1603 = vpack.c.b16 %v1592, %v1591
    %v1604 = vpack.c.b16 %v1594, %v1593
    %v1605 = vpack.c.b16 %v1596, %v1595
    %v1606 = vpack.c.b16 %v1598, %v1597
    %1615 = vmatpush.bf16.msra.mxu0 %v1606
    %1616 = vmatpush.bf16.msra.mxu0 %v1605
    %1617 = vmatpush.bf16.msra.mxu0 %v1604
    %1618 = vmatpush.bf16.msra.mxu0 %v1603
    %1619 = vmatpush.bf16.msra.mxu0 %v1602
    %1620 = vmatpush.bf16.msra.mxu0 %v1601
    %1621 = vmatpush.bf16.msra.mxu0 %v1600
    %1622 = vmatpush.bf16.msra.mxu0 %v1599
    %1623 = vmatmul.bf16.gmra.mxu0 %v1551
    %v1624 = vpop.f32.mrf.mxu0
    %v1625 = vadd.f32 0.0, %v1624
    %v1626 = vpop.f32.mrf.mxu0
    %v1627 = vadd.f32 0.0, %v1626
    %1628 = vmatmul.bf16.gmra.mxu0 %v1552
    %v1629 = vpop.f32.mrf.mxu0
    %v1630 = vadd.f32 0.0, %v1629
    %v1631 = vpop.f32.mrf.mxu0
    %v1632 = vadd.f32 0.0, %v1631
    %1633 = vmatmul.bf16.gmra.mxu0 %v1553
    %v1634 = vpop.f32.mrf.mxu0
    %v1635 = vadd.f32 0.0, %v1634
    %v1636 = vpop.f32.mrf.mxu0
    %v1637 = vadd.f32 0.0, %v1636
    %1638 = vmatmul.bf16.gmra.mxu0 %v1554
    %v1639 = vpop.f32.mrf.mxu0
    %v1640 = vadd.f32 0.0, %v1639
    %v1641 = vpop.f32.mrf.mxu0
    %v1642 = vadd.f32 0.0, %v1641
    %1643 = vmatmul.bf16.gmra.mxu0 %v1555
    %v1644 = vpop.f32.mrf.mxu0
    %v1645 = vadd.f32 0.0, %v1644
    %v1646 = vpop.f32.mrf.mxu0
    %v1647 = vadd.f32 0.0, %v1646
    %1648 = vmatmul.bf16.gmra.mxu0 %v1556
    %v1649 = vpop.f32.mrf.mxu0
    %v1650 = vadd.f32 0.0, %v1649
    %v1651 = vpop.f32.mrf.mxu0
    %v1652 = vadd.f32 0.0, %v1651
    %1653 = vmatmul.bf16.gmra.mxu0 %v1557
    %v1654 = vpop.f32.mrf.mxu0
    %v1655 = vadd.f32 0.0, %v1654
    %v1656 = vpop.f32.mrf.mxu0
    %v1657 = vadd.f32 0.0, %v1656
    %1658 = vmatmul.bf16.gmra.mxu0 %v1558
    %v1659 = vpop.f32.mrf.mxu0
    %v1660 = vadd.f32 0.0, %v1659
    %v1661 = vpop.f32.mrf.mxu0
    %v1662 = vadd.f32 0.0, %v1661
    %1663 = vdwg.mxu0
    %v1664 = vld [vmem:[%s1] sm:$0xff]
    %v1665 = vld [vmem:[%s1 + $0x8] sm:$0xff]
    %v1666 = vld [vmem:[%s1 + $0x10] sm:$0xff]
    %v1667 = vld [vmem:[%s1 + $0x18] sm:$0xff]
    %v1668 = vld [vmem:[%s1 + $0x20] sm:$0xff]
    %v1669 = vld [vmem:[%s1 + $0x28] sm:$0xff]
    %v1670 = vld [vmem:[%s1 + $0x30] sm:$0xff]
    %v1671 = vld [vmem:[%s1 + $0x38] sm:$0xff]
    %v1672 = vld [vmem:[%s1 + $0x40] sm:$0xff]
    %v1673 = vld [vmem:[%s1 + $0x48] sm:$0xff]
    %v1674 = vld [vmem:[%s1 + $0x50] sm:$0xff]
    %v1675 = vld [vmem:[%s1 + $0x58] sm:$0xff]
    %v1676 = vld [vmem:[%s1 + $0x60] sm:$0xff]
    %v1677 = vld [vmem:[%s1 + $0x68] sm:$0xff]
    %v1678 = vld [vmem:[%s1 + $0x70] sm:$0xff]
    %v1679 = vld [vmem:[%s1 + $0x78] sm:$0xff]
    %1681 = vset.pattern.permute.xlu0 0
    %1682 = vperm.xlu0 %1681, %v1664
    %v1683 = vpop.permute.xlu0 %1682
    %1686 = vset.pattern.permute.xlu0 0
    %1687 = vperm.xlu0 %1686, %v1665
    %v1688 = vpop.permute.xlu0 %1687
    %1691 = vset.pattern.permute.xlu0 0
    %1692 = vperm.xlu0 %1691, %v1666
    %v1693 = vpop.permute.xlu0 %1692
    %1696 = vset.pattern.permute.xlu0 0
    %1697 = vperm.xlu0 %1696, %v1667
    %v1698 = vpop.permute.xlu0 %1697
    %1701 = vset.pattern.permute.xlu0 0
    %1702 = vperm.xlu0 %1701, %v1668
    %v1703 = vpop.permute.xlu0 %1702
    %1706 = vset.pattern.permute.xlu0 0
    %1707 = vperm.xlu0 %1706, %v1669
    %v1708 = vpop.permute.xlu0 %1707
    %1711 = vset.pattern.permute.xlu0 0
    %1712 = vperm.xlu0 %1711, %v1670
    %v1713 = vpop.permute.xlu0 %1712
    %1716 = vset.pattern.permute.xlu0 0
    %1717 = vperm.xlu0 %1716, %v1671
    %v1718 = vpop.permute.xlu0 %1717
    %1721 = vset.pattern.permute.xlu0 0
    %1722 = vperm.xlu0 %1721, %v1672
    %v1723 = vpop.permute.xlu0 %1722
    %1726 = vset.pattern.permute.xlu0 0
    %1727 = vperm.xlu0 %1726, %v1673
    %v1728 = vpop.permute.xlu0 %1727
    %1731 = vset.pattern.permute.xlu0 0
    %1732 = vperm.xlu0 %1731, %v1674
    %v1733 = vpop.permute.xlu0 %1732
    %1736 = vset.pattern.permute.xlu0 0
    %1737 = vperm.xlu0 %1736, %v1675
    %v1738 = vpop.permute.xlu0 %1737
    %1741 = vset.pattern.permute.xlu0 0
    %1742 = vperm.xlu0 %1741, %v1676
    %v1743 = vpop.permute.xlu0 %1742
    %1746 = vset.pattern.permute.xlu0 0
    %1747 = vperm.xlu0 %1746, %v1677
    %v1748 = vpop.permute.xlu0 %1747
    %1751 = vset.pattern.permute.xlu0 0
    %1752 = vperm.xlu0 %1751, %v1678
    %v1753 = vpop.permute.xlu0 %1752
    %1756 = vset.pattern.permute.xlu0 0
    %1757 = vperm.xlu0 %1756, %v1679
    %v1758 = vpop.permute.xlu0 %1757
    %v1760 = vmul.f32 %v1683, %v1625
    %v1761 = vmul.f32 %v1688, %v1627
    %v1762 = vmul.f32 %v1693, %v1630
    %v1763 = vmul.f32 %v1698, %v1632
    %v1764 = vmul.f32 %v1703, %v1635
    %v1765 = vmul.f32 %v1708, %v1637
    %v1766 = vmul.f32 %v1713, %v1640
    %v1767 = vmul.f32 %v1718, %v1642
    %v1768 = vmul.f32 %v1723, %v1645
    %v1769 = vmul.f32 %v1728, %v1647
    %v1770 = vmul.f32 %v1733, %v1650
    %v1771 = vmul.f32 %v1738, %v1652
    %v1772 = vmul.f32 %v1743, %v1655
    %v1773 = vmul.f32 %v1748, %v1657
    %v1774 = vmul.f32 %v1753, %v1660
    %v1775 = vmul.f32 %v1758, %v1662
    %v1776 = vpack.c.bf16 %v1760, %v1760
    %v1777 = vpack.c.bf16 %v1761, %v1761
    %v1778 = vpack.c.bf16 %v1762, %v1762
    %v1779 = vpack.c.bf16 %v1763, %v1763
    %v1780 = vpack.c.bf16 %v1764, %v1764
    %v1781 = vpack.c.bf16 %v1765, %v1765
    %v1782 = vpack.c.bf16 %v1766, %v1766
    %v1783 = vpack.c.bf16 %v1767, %v1767
    %v1784 = vpack.c.bf16 %v1768, %v1768
    %v1785 = vpack.c.bf16 %v1769, %v1769
    %v1786 = vpack.c.bf16 %v1770, %v1770
    %v1787 = vpack.c.bf16 %v1771, %v1771
    %v1788 = vpack.c.bf16 %v1772, %v1772
    %v1789 = vpack.c.bf16 %v1773, %v1773
    %v1790 = vpack.c.bf16 %v1774, %v1774
    %v1791 = vpack.c.bf16 %v1775, %v1775
    %1792 = vst [vmem:[#allocation2] sm:$0xf] %v1454
    %1793 = vst [vmem:[#allocation2 + $0x8] sm:$0xf] %v1455
    %1794 = vst [vmem:[#allocation2 + $0x10] sm:$0xf] %v1456
    %1795 = vst [vmem:[#allocation2 + $0x18] sm:$0xf] %v1457
    %1796 = vst [vmem:[#allocation2 + $0x20] sm:$0xf] %v1458
    %1797 = vst [vmem:[#allocation2 + $0x28] sm:$0xf] %v1459
    %1798 = vst [vmem:[#allocation2 + $0x30] sm:$0xf] %v1460
    %1799 = vst [vmem:[#allocation2 + $0x38] sm:$0xf] %v1461
    %1800 = vst [vmem:[#allocation2 + $0x40] sm:$0xf] %v1462
    %1801 = vst [vmem:[#allocation2 + $0x48] sm:$0xf] %v1463
    %1802 = vst [vmem:[#allocation2 + $0x50] sm:$0xf] %v1464
    %1803 = vst [vmem:[#allocation2 + $0x58] sm:$0xf] %v1465
    %1804 = vst [vmem:[#allocation2 + $0x60] sm:$0xf] %v1466
    %1805 = vst [vmem:[#allocation2 + $0x68] sm:$0xf] %v1467
    %1806 = vst [vmem:[#allocation2 + $0x70] sm:$0xf] %v1468
    %1807 = vst [vmem:[#allocation2 + $0x78] sm:$0xf] %v1469
    %1808 = vst [vmem:[#allocation2 + $0x4] sm:$0xf] %v1776
    %1809 = vst [vmem:[#allocation2 + $0xc] sm:$0xf] %v1777
    %1810 = vst [vmem:[#allocation2 + $0x14] sm:$0xf] %v1778
    %1811 = vst [vmem:[#allocation2 + $0x1c] sm:$0xf] %v1779
    %1812 = vst [vmem:[#allocation2 + $0x24] sm:$0xf] %v1780
    %1813 = vst [vmem:[#allocation2 + $0x2c] sm:$0xf] %v1781
    %1814 = vst [vmem:[#allocation2 + $0x34] sm:$0xf] %v1782
    %1815 = vst [vmem:[#allocation2 + $0x3c] sm:$0xf] %v1783
    %1816 = vst [vmem:[#allocation2 + $0x44] sm:$0xf] %v1784
    %1817 = vst [vmem:[#allocation2 + $0x4c] sm:$0xf] %v1785
    %1818 = vst [vmem:[#allocation2 + $0x54] sm:$0xf] %v1786
    %1819 = vst [vmem:[#allocation2 + $0x5c] sm:$0xf] %v1787
    %1820 = vst [vmem:[#allocation2 + $0x64] sm:$0xf] %v1788
    %1821 = vst [vmem:[#allocation2 + $0x6c] sm:$0xf] %v1789
    %1822 = vst [vmem:[#allocation2 + $0x74] sm:$0xf] %v1790
    %1823 = vst [vmem:[#allocation2 + $0x7c] sm:$0xf] %v1791
    %v1824 = vld [vmem:[#allocation2] sm:$0xff]
    %v1825 = vld [vmem:[#allocation2 + $0x8] sm:$0xff]
    %v1826 = vld [vmem:[#allocation2 + $0x10] sm:$0xff]
    %v1827 = vld [vmem:[#allocation2 + $0x18] sm:$0xff]
    %v1828 = vld [vmem:[#allocation2 + $0x20] sm:$0xff]
    %v1829 = vld [vmem:[#allocation2 + $0x28] sm:$0xff]
    %v1830 = vld [vmem:[#allocation2 + $0x30] sm:$0xff]
    %v1831 = vld [vmem:[#allocation2 + $0x38] sm:$0xff]
    %v1832 = vld [vmem:[#allocation2 + $0x40] sm:$0xff]
    %v1833 = vld [vmem:[#allocation2 + $0x48] sm:$0xff]
    %v1834 = vld [vmem:[#allocation2 + $0x50] sm:$0xff]
    %v1835 = vld [vmem:[#allocation2 + $0x58] sm:$0xff]
    %v1836 = vld [vmem:[#allocation2 + $0x60] sm:$0xff]
    %v1837 = vld [vmem:[#allocation2 + $0x68] sm:$0xff]
    %v1838 = vld [vmem:[#allocation2 + $0x70] sm:$0xff]
    %v1839 = vld [vmem:[#allocation2 + $0x78] sm:$0xff]
    %v1841 = vperm.slane %v1502, 0
    %v1859 = vunpack.c.l.b16 %v1824
    %v1860 = vunpack.c.h.b16 %v1824
    %v1861 = vunpack.c.l.b16 %v1825
    %v1862 = vunpack.c.h.b16 %v1825
    %v1863 = vunpack.c.l.b16 %v1826
    %v1864 = vunpack.c.h.b16 %v1826
    %v1865 = vunpack.c.l.b16 %v1827
    %v1866 = vunpack.c.h.b16 %v1827
    %v1867 = vunpack.c.l.b16 %v1828
    %v1868 = vunpack.c.h.b16 %v1828
    %v1869 = vunpack.c.l.b16 %v1829
    %v1870 = vunpack.c.h.b16 %v1829
    %v1871 = vunpack.c.l.b16 %v1830
    %v1872 = vunpack.c.h.b16 %v1830
    %v1873 = vunpack.c.l.b16 %v1831
    %v1874 = vunpack.c.h.b16 %v1831
    %v1875 = vunpack.c.l.b16 %v1832
    %v1876 = vunpack.c.h.b16 %v1832
    %v1877 = vunpack.c.l.b16 %v1833
    %v1878 = vunpack.c.h.b16 %v1833
    %v1879 = vunpack.c.l.b16 %v1834
    %v1880 = vunpack.c.h.b16 %v1834
    %v1881 = vunpack.c.l.b16 %v1835
    %v1882 = vunpack.c.h.b16 %v1835
    %v1883 = vunpack.c.l.b16 %v1836
    %v1884 = vunpack.c.h.b16 %v1836
    %v1885 = vunpack.c.l.b16 %v1837
    %v1886 = vunpack.c.h.b16 %v1837
    %v1887 = vunpack.c.l.b16 %v1838
    %v1888 = vunpack.c.h.b16 %v1838
    %v1889 = vunpack.c.l.b16 %v1839
    %v1890 = vunpack.c.h.b16 %v1839
    %v1891 = vpack.c.b16 %v1861, %v1859
    %v1892 = vpack.c.b16 %v1862, %v1860
    %v1893 = vpack.c.b16 %v1865, %v1863
    %v1894 = vpack.c.b16 %v1866, %v1864
    %v1895 = vpack.c.b16 %v1869, %v1867
    %v1896 = vpack.c.b16 %v1870, %v1868
    %v1897 = vpack.c.b16 %v1873, %v1871
    %v1898 = vpack.c.b16 %v1874, %v1872
    %v1899 = vpack.c.b16 %v1877, %v1875
    %v1900 = vpack.c.b16 %v1878, %v1876
    %v1901 = vpack.c.b16 %v1881, %v1879
    %v1902 = vpack.c.b16 %v1882, %v1880
    %v1903 = vpack.c.b16 %v1885, %v1883
    %v1904 = vpack.c.b16 %v1886, %v1884
    %v1905 = vpack.c.b16 %v1889, %v1887
    %v1906 = vpack.c.b16 %v1890, %v1888
    %v1955 = vunpack.c.l.b16 %v1470
    %v1956 = vunpack.c.l.b16 %v1471
    %v1957 = vunpack.c.l.b16 %v1472
    %v1958 = vunpack.c.l.b16 %v1473
    %v1959 = vunpack.c.l.b16 %v1474
    %v1960 = vunpack.c.l.b16 %v1475
    %v1961 = vunpack.c.l.b16 %v1476
    %v1962 = vunpack.c.l.b16 %v1477
    %v1963 = vunpack.c.l.b16 %v1478
    %v1964 = vunpack.c.l.b16 %v1479
    %v1965 = vunpack.c.l.b16 %v1480
    %v1966 = vunpack.c.l.b16 %v1481
    %v1967 = vunpack.c.l.b16 %v1482
    %v1968 = vunpack.c.l.b16 %v1483
    %v1969 = vunpack.c.l.b16 %v1484
    %v1970 = vunpack.c.l.b16 %v1485
    %v1971 = vunpack.c.l.b16 %v1486
    %v1972 = vunpack.c.l.b16 %v1487
    %v1973 = vunpack.c.l.b16 %v1488
    %v1974 = vunpack.c.l.b16 %v1489
    %v1975 = vunpack.c.l.b16 %v1490
    %v1976 = vunpack.c.l.b16 %v1491
    %v1977 = vunpack.c.l.b16 %v1492
    %v1978 = vunpack.c.l.b16 %v1493
    %v1979 = vunpack.c.l.b16 %v1494
    %v1980 = vunpack.c.l.b16 %v1495
    %v1981 = vunpack.c.l.b16 %v1496
    %v1982 = vunpack.c.l.b16 %v1497
    %v1983 = vunpack.c.l.b16 %v1498
    %v1984 = vunpack.c.l.b16 %v1499
    %v1985 = vunpack.c.l.b16 %v1500
    %v1986 = vunpack.c.l.b16 %v1501
    %v1987 = vpack.c.b16 %v1956, %v1955
    %v1988 = vpack.c.b16 %v1958, %v1957
    %v1989 = vpack.c.b16 %v1960, %v1959
    %v1990 = vpack.c.b16 %v1962, %v1961
    %v1991 = vpack.c.b16 %v1964, %v1963
    %v1992 = vpack.c.b16 %v1966, %v1965
    %v1993 = vpack.c.b16 %v1968, %v1967
    %v1994 = vpack.c.b16 %v1970, %v1969
    %v1995 = vpack.c.b16 %v1972, %v1971
    %v1996 = vpack.c.b16 %v1974, %v1973
    %v1997 = vpack.c.b16 %v1976, %v1975
    %v1998 = vpack.c.b16 %v1978, %v1977
    %v1999 = vpack.c.b16 %v1980, %v1979
    %v2000 = vpack.c.b16 %v1982, %v1981
    %v2001 = vpack.c.b16 %v1984, %v1983
    %v2002 = vpack.c.b16 %v1986, %v1985
    %2019 = vmatpush.bf16.msra.mxu0 %v1994
    %2020 = vmatpush.bf16.msra.mxu0 %v1993
    %2021 = vmatpush.bf16.msra.mxu0 %v1992
    %2022 = vmatpush.bf16.msra.mxu0 %v1991
    %2023 = vmatpush.bf16.msra.mxu0 %v1990
    %2024 = vmatpush.bf16.msra.mxu0 %v1989
    %2025 = vmatpush.bf16.msra.mxu0 %v1988
    %2026 = vmatpush.bf16.msra.mxu0 %v1987
    %2027 = vmatmul.bf16.gmra.mxu0 %v1891
    %v2028 = vpop.f32.mrf.mxu0
    %v2029 = vadd.f32 %v1841, %v2028
    %v2030 = vpop.f32.mrf.mxu0
    %v2031 = vadd.f32 %v1841, %v2030
    %2032 = vmatmul.bf16.gmra.mxu0 %v1893
    %v2033 = vpop.f32.mrf.mxu0
    %v2034 = vadd.f32 %v1841, %v2033
    %v2035 = vpop.f32.mrf.mxu0
    %v2036 = vadd.f32 %v1841, %v2035
    %2037 = vmatmul.bf16.gmra.mxu0 %v1895
    %v2038 = vpop.f32.mrf.mxu0
    %v2039 = vadd.f32 %v1841, %v2038
    %v2040 = vpop.f32.mrf.mxu0
    %v2041 = vadd.f32 %v1841, %v2040
    %2042 = vmatmul.bf16.gmra.mxu0 %v1897
    %v2043 = vpop.f32.mrf.mxu0
    %v2044 = vadd.f32 %v1841, %v2043
    %v2045 = vpop.f32.mrf.mxu0
    %v2046 = vadd.f32 %v1841, %v2045
    %2047 = vmatmul.bf16.gmra.mxu0 %v1899
    %v2048 = vpop.f32.mrf.mxu0
    %v2049 = vadd.f32 %v1841, %v2048
    %v2050 = vpop.f32.mrf.mxu0
    %v2051 = vadd.f32 %v1841, %v2050
    %2052 = vmatmul.bf16.gmra.mxu0 %v1901
    %v2053 = vpop.f32.mrf.mxu0
    %v2054 = vadd.f32 %v1841, %v2053
    %v2055 = vpop.f32.mrf.mxu0
    %v2056 = vadd.f32 %v1841, %v2055
    %2057 = vmatmul.bf16.gmra.mxu0 %v1903
    %v2058 = vpop.f32.mrf.mxu0
    %v2059 = vadd.f32 %v1841, %v2058
    %v2060 = vpop.f32.mrf.mxu0
    %v2061 = vadd.f32 %v1841, %v2060
    %2062 = vmatmul.bf16.gmra.mxu0 %v1905
    %v2063 = vpop.f32.mrf.mxu0
    %v2064 = vadd.f32 %v1841, %v2063
    %v2065 = vpop.f32.mrf.mxu0
    %v2066 = vadd.f32 %v1841, %v2065
    %2067 = vdwg.mxu0
    %2068 = vmatpush.bf16.msra.mxu0 %v2002
    %2069 = vmatpush.bf16.msra.mxu0 %v2001
    %2070 = vmatpush.bf16.msra.mxu0 %v2000
    %2071 = vmatpush.bf16.msra.mxu0 %v1999
    %2072 = vmatpush.bf16.msra.mxu0 %v1998
    %2073 = vmatpush.bf16.msra.mxu0 %v1997
    %2074 = vmatpush.bf16.msra.mxu0 %v1996
    %2075 = vmatpush.bf16.msra.mxu0 %v1995
    %2076 = vmatmul.bf16.gmra.mxu0 %v1892
    %v2077 = vpop.f32.mrf.mxu0
    %v2078 = vadd.f32 %v2029, %v2077
    %v2079 = vpop.f32.mrf.mxu0
    %v2080 = vadd.f32 %v2031, %v2079
    %2081 = vmatmul.bf16.gmra.mxu0 %v1894
    %v2082 = vpop.f32.mrf.mxu0
    %v2083 = vadd.f32 %v2034, %v2082
    %v2084 = vpop.f32.mrf.mxu0
    %v2085 = vadd.f32 %v2036, %v2084
    %2086 = vmatmul.bf16.gmra.mxu0 %v1896
    %v2087 = vpop.f32.mrf.mxu0
    %v2088 = vadd.f32 %v2039, %v2087
    %v2089 = vpop.f32.mrf.mxu0
    %v2090 = vadd.f32 %v2041, %v2089
    %2091 = vmatmul.bf16.gmra.mxu0 %v1898
    %v2092 = vpop.f32.mrf.mxu0
    %v2093 = vadd.f32 %v2044, %v2092
    %v2094 = vpop.f32.mrf.mxu0
    %v2095 = vadd.f32 %v2046, %v2094
    %2096 = vmatmul.bf16.gmra.mxu0 %v1900
    %v2097 = vpop.f32.mrf.mxu0
    %v2098 = vadd.f32 %v2049, %v2097
    %v2099 = vpop.f32.mrf.mxu0
    %v2100 = vadd.f32 %v2051, %v2099
    %2101 = vmatmul.bf16.gmra.mxu0 %v1902
    %v2102 = vpop.f32.mrf.mxu0
    %v2103 = vadd.f32 %v2054, %v2102
    %v2104 = vpop.f32.mrf.mxu0
    %v2105 = vadd.f32 %v2056, %v2104
    %2106 = vmatmul.bf16.gmra.mxu0 %v1904
    %v2107 = vpop.f32.mrf.mxu0
    %v2108 = vadd.f32 %v2059, %v2107
    %v2109 = vpop.f32.mrf.mxu0
    %v2110 = vadd.f32 %v2061, %v2109
    %2111 = vmatmul.bf16.gmra.mxu0 %v1906
    %v2112 = vpop.f32.mrf.mxu0
    %v2113 = vadd.f32 %v2064, %v2112
    %v2114 = vpop.f32.mrf.mxu0
    %v2115 = vadd.f32 %v2066, %v2114
    %2116 = vdwg.mxu0
    %2117 = vmax.xlane.f32.xlu0 %v2078
    %v2118 = vpop.xlane.xlu0 %2117
    %2119 = vmax.xlane.f32.xlu0 %v2080
    %v2120 = vpop.xlane.xlu0 %2119
    %2121 = vmax.xlane.f32.xlu0 %v2083
    %v2122 = vpop.xlane.xlu0 %2121
    %2123 = vmax.xlane.f32.xlu0 %v2085
    %v2124 = vpop.xlane.xlu0 %2123
    %2125 = vmax.xlane.f32.xlu0 %v2088
    %v2126 = vpop.xlane.xlu0 %2125
    %2127 = vmax.xlane.f32.xlu0 %v2090
    %v2128 = vpop.xlane.xlu0 %2127
    %2129 = vmax.xlane.f32.xlu0 %v2093
    %v2130 = vpop.xlane.xlu0 %2129
    %2131 = vmax.xlane.f32.xlu0 %v2095
    %v2132 = vpop.xlane.xlu0 %2131
    %2133 = vmax.xlane.f32.xlu0 %v2098
    %v2134 = vpop.xlane.xlu0 %2133
    %2135 = vmax.xlane.f32.xlu0 %v2100
    %v2136 = vpop.xlane.xlu0 %2135
    %2137 = vmax.xlane.f32.xlu0 %v2103
    %v2138 = vpop.xlane.xlu0 %2137
    %2139 = vmax.xlane.f32.xlu0 %v2105
    %v2140 = vpop.xlane.xlu0 %2139
    %2141 = vmax.xlane.f32.xlu0 %v2108
    %v2142 = vpop.xlane.xlu0 %2141
    %2143 = vmax.xlane.f32.xlu0 %v2110
    %v2144 = vpop.xlane.xlu0 %2143
    %2145 = vmax.xlane.f32.xlu0 %v2113
    %v2146 = vpop.xlane.xlu0 %2145
    %2147 = vmax.xlane.f32.xlu0 %v2115
    %v2148 = vpop.xlane.xlu0 %2147
    %v2149 = vsub.f32 %v2078, %v2118
    %v2150 = vsub.f32 %v2080, %v2120
    %v2151 = vsub.f32 %v2083, %v2122
    %v2152 = vsub.f32 %v2085, %v2124
    %v2153 = vsub.f32 %v2088, %v2126
    %v2154 = vsub.f32 %v2090, %v2128
    %v2155 = vsub.f32 %v2093, %v2130
    %v2156 = vsub.f32 %v2095, %v2132
    %v2157 = vsub.f32 %v2098, %v2134
    %v2158 = vsub.f32 %v2100, %v2136
    %v2159 = vsub.f32 %v2103, %v2138
    %v2160 = vsub.f32 %v2105, %v2140
    %v2161 = vsub.f32 %v2108, %v2142
    %v2162 = vsub.f32 %v2110, %v2144
    %v2163 = vsub.f32 %v2113, %v2146
    %v2164 = vsub.f32 %v2115, %v2148
    %v2165 = vmul.f32 %v2149, 1.442695
    %v2166 = vpow.pop %v2165
    %v2167 = vmul.f32 %v2150, 1.442695
    %v2168 = vpow.pop %v2167
    %v2169 = vmul.f32 %v2151, 1.442695
    %v2170 = vpow.pop %v2169
    %v2171 = vmul.f32 %v2152, 1.442695
    %v2172 = vpow.pop %v2171
    %v2173 = vmul.f32 %v2153, 1.442695
    %v2174 = vpow.pop %v2173
    %v2175 = vmul.f32 %v2154, 1.442695
    %v2176 = vpow.pop %v2175
    %v2177 = vmul.f32 %v2155, 1.442695
    %v2178 = vpow.pop %v2177
    %v2179 = vmul.f32 %v2156, 1.442695
    %v2180 = vpow.pop %v2179
    %v2181 = vmul.f32 %v2157, 1.442695
    %v2182 = vpow.pop %v2181
    %v2183 = vmul.f32 %v2158, 1.442695
    %v2184 = vpow.pop %v2183
    %v2185 = vmul.f32 %v2159, 1.442695
    %v2186 = vpow.pop %v2185
    %v2187 = vmul.f32 %v2160, 1.442695
    %v2188 = vpow.pop %v2187
    %v2189 = vmul.f32 %v2161, 1.442695
    %v2190 = vpow.pop %v2189
    %v2191 = vmul.f32 %v2162, 1.442695
    %v2192 = vpow.pop %v2191
    %v2193 = vmul.f32 %v2163, 1.442695
    %v2194 = vpow.pop %v2193
    %v2195 = vmul.f32 %v2164, 1.442695
    %v2196 = vpow.pop %v2195
    %2197 = vadd.xlane.f32.xlu0 %v2166
    %v2198 = vpop.xlane.xlu0 %2197
    %2199 = vadd.xlane.f32.xlu0 %v2168
    %v2200 = vpop.xlane.xlu0 %2199
    %2201 = vadd.xlane.f32.xlu0 %v2170
    %v2202 = vpop.xlane.xlu0 %2201
    %2203 = vadd.xlane.f32.xlu0 %v2172
    %v2204 = vpop.xlane.xlu0 %2203
    %2205 = vadd.xlane.f32.xlu0 %v2174
    %v2206 = vpop.xlane.xlu0 %2205
    %2207 = vadd.xlane.f32.xlu0 %v2176
    %v2208 = vpop.xlane.xlu0 %2207
    %2209 = vadd.xlane.f32.xlu0 %v2178
    %v2210 = vpop.xlane.xlu0 %2209
    %2211 = vadd.xlane.f32.xlu0 %v2180
    %v2212 = vpop.xlane.xlu0 %2211
    %2213 = vadd.xlane.f32.xlu0 %v2182
    %v2214 = vpop.xlane.xlu0 %2213
    %2215 = vadd.xlane.f32.xlu0 %v2184
    %v2216 = vpop.xlane.xlu0 %2215
    %2217 = vadd.xlane.f32.xlu0 %v2186
    %v2218 = vpop.xlane.xlu0 %2217
    %2219 = vadd.xlane.f32.xlu0 %v2188
    %v2220 = vpop.xlane.xlu0 %2219
    %2221 = vadd.xlane.f32.xlu0 %v2190
    %v2222 = vpop.xlane.xlu0 %2221
    %2223 = vadd.xlane.f32.xlu0 %v2192
    %v2224 = vpop.xlane.xlu0 %2223
    %2225 = vadd.xlane.f32.xlu0 %v2194
    %v2226 = vpop.xlane.xlu0 %2225
    %2227 = vadd.xlane.f32.xlu0 %v2196
    %v2228 = vpop.xlane.xlu0 %2227
    %v2229 = vlog2.pop %v2198
    %v2230 = vmul.f32 %v2229, 0.6931472
    %v2231 = vlog2.pop %v2200
    %v2232 = vmul.f32 %v2231, 0.6931472
    %v2233 = vlog2.pop %v2202
    %v2234 = vmul.f32 %v2233, 0.6931472
    %v2235 = vlog2.pop %v2204
    %v2236 = vmul.f32 %v2235, 0.6931472
    %v2237 = vlog2.pop %v2206
    %v2238 = vmul.f32 %v2237, 0.6931472
    %v2239 = vlog2.pop %v2208
    %v2240 = vmul.f32 %v2239, 0.6931472
    %v2241 = vlog2.pop %v2210
    %v2242 = vmul.f32 %v2241, 0.6931472
    %v2243 = vlog2.pop %v2212
    %v2244 = vmul.f32 %v2243, 0.6931472
    %v2245 = vlog2.pop %v2214
    %v2246 = vmul.f32 %v2245, 0.6931472
    %v2247 = vlog2.pop %v2216
    %v2248 = vmul.f32 %v2247, 0.6931472
    %v2249 = vlog2.pop %v2218
    %v2250 = vmul.f32 %v2249, 0.6931472
    %v2251 = vlog2.pop %v2220
    %v2252 = vmul.f32 %v2251, 0.6931472
    %v2253 = vlog2.pop %v2222
    %v2254 = vmul.f32 %v2253, 0.6931472
    %v2255 = vlog2.pop %v2224
    %v2256 = vmul.f32 %v2255, 0.6931472
    %v2257 = vlog2.pop %v2226
    %v2258 = vmul.f32 %v2257, 0.6931472
    %v2259 = vlog2.pop %v2228
    %v2260 = vmul.f32 %v2259, 0.6931472
    %v2261 = vsub.f32 %v2149, %v2230
    %v2262 = vsub.f32 %v2150, %v2232
    %v2263 = vsub.f32 %v2151, %v2234
    %v2264 = vsub.f32 %v2152, %v2236
    %v2265 = vsub.f32 %v2153, %v2238
    %v2266 = vsub.f32 %v2154, %v2240
    %v2267 = vsub.f32 %v2155, %v2242
    %v2268 = vsub.f32 %v2156, %v2244
    %v2269 = vsub.f32 %v2157, %v2246
    %v2270 = vsub.f32 %v2158, %v2248
    %v2271 = vsub.f32 %v2159, %v2250
    %v2272 = vsub.f32 %v2160, %v2252
    %v2273 = vsub.f32 %v2161, %v2254
    %v2274 = vsub.f32 %v2162, %v2256
    %v2275 = vsub.f32 %v2163, %v2258
    %v2276 = vsub.f32 %v2164, %v2260
    %2277 = vst [vmem:[#allocation11] sm:$0xff] %v2261
    %2278 = vst [vmem:[#allocation11 + $0x8] sm:$0xff] %v2262
    %2279 = vst [vmem:[#allocation11 + $0x10] sm:$0xff] %v2263
    %2280 = vst [vmem:[#allocation11 + $0x18] sm:$0xff] %v2264
    %2281 = vst [vmem:[#allocation11 + $0x20] sm:$0xff] %v2265
    %2282 = vst [vmem:[#allocation11 + $0x28] sm:$0xff] %v2266
    %2283 = vst [vmem:[#allocation11 + $0x30] sm:$0xff] %v2267
    %2284 = vst [vmem:[#allocation11 + $0x38] sm:$0xff] %v2268
    %2285 = vst [vmem:[#allocation11 + $0x40] sm:$0xff] %v2269
    %2286 = vst [vmem:[#allocation11 + $0x48] sm:$0xff] %v2270
    %2287 = vst [vmem:[#allocation11 + $0x50] sm:$0xff] %v2271
    %2288 = vst [vmem:[#allocation11 + $0x58] sm:$0xff] %v2272
    %2289 = vst [vmem:[#allocation11 + $0x60] sm:$0xff] %v2273
    %2290 = vst [vmem:[#allocation11 + $0x68] sm:$0xff] %v2274
    %2291 = vst [vmem:[#allocation11 + $0x70] sm:$0xff] %v2275
    %2292 = vst [vmem:[#allocation11 + $0x78] sm:$0xff] %v2276
    // Predicated region
    $region54: #{tpu_custom_call.1} parent=1 // pred_check
      _
    $region55: #{tpu_custom_call.1} parent=1 // pred_check_branch
      %2294 = sbr.rel (0) target = $region57
    $region56: #{tpu_custom_call.1} parent=1 // pred_region
      %2296 = vsyncadd [#allocation5], 0
      %s2297 = sshll.u32 [#allocation11], 4
      %s2298 = int_to_ptr.vmem [resolvable:$true] %s2297
      %s2299 = sshll.u32 %s9, 4
      %s2300 = int_to_ptr.hbm [resolvable:$true] %s2299
      %2305 = dma.vmem_to_hbm [thread:$0]  %s2298, 2048, %s2300, [#allocation5], 128, 128, 8
    $region57: #{tpu_custom_call.1} parent=1 // pred_fallthru
      _
    // Predicated region
    $region58: #{tpu_custom_call.1} parent=1 // pred_check
      _
    $region59: #{tpu_custom_call.1} parent=1 // pred_check_branch
      %2307 = sbr.rel (0) target = $region61
    $region60: #{tpu_custom_call.1} parent=1 // pred_region
      %2309 = dma.done [#allocation5], 2048
    $region61: #{tpu_custom_call.1} parent=1 // pred_fallthru
      _
    %2310 = vsyncpa [#allocation4], 1
    %2311 = vsyncpa [#allocation7], 1
    %2312 = vsyncpa [#allocation10], 1
    %2313 = vsyncpa [#allocation5], 1

</llo_original>
